<compile_context>
chip_gen: v7x
topology: tpu7x:2x2x1
jax: 0.10.0
libtpu: 0.0.40
codegen_flags: <defaults>
</compile_context>

<pallas_src>
import jax
import jax.numpy as jnp
import numpy as np
from jax import lax
from jax.experimental import pallas as pl
from jax.experimental.pallas import tpu as pltpu

# Synthetic ATOM_FEATURES: vocab size of each categorical atom feature and the
# embedding width requested for each (lengths must match).
ATOM_VOCAB_SIZES = (8, 6, 5, 4)      # ATOM_FEATURES[i].size()
ATOM_EMBED_SIZES = (16, 8, 4, 4)     # atom_embed_size
TOTAL_EMBED = sum(ATOM_EMBED_SIZES)  # 32


def _round_up(x, m):
    return -(-x // m) * m


def _atom_embedding_kernel(idx_ref, spread_ref, table_ref, out_ref):
    """One fused lookup per (tile, W) output tile.

    idx_ref    : (T, C) int32 -- offsetted packed indices, values in [0, K)
    spread_ref : (C, K) f32   -- S[c, k] = 1.0 iff k // v_block == c (resident)
    table_ref  : (K, W) f32   -- block-diagonal stacked tables      (resident)
    out_ref    : (T, W) f32   -- lane-dense packed output
    """
    # Spread each index column across its v_block-wide lane block with one small
    # MXU matmul: spread[t, k] = idx[t, k // v_block].  Exact (integer values,
    # HIGHEST precision splits f32 exactly), so the equality compare is reliable.
    idx_f = idx_ref[...].astype(jnp.float32)                       # (T, C)
    spread = jnp.dot(idx_f, spread_ref[...],
                     preferred_element_type=jnp.float32,
                     precision=jax.lax.Precision.HIGHEST)          # (T, K)

    # Single compare + single cast builds the whole multi-hot matrix.
    k_rows = table_ref.shape[0]
    lane = lax.broadcasted_iota(jnp.int32, (1, k_rows), 1).astype(jnp.float32)
    mh = (spread == lane).astype(jnp.float32)                      # (T, K)

    # One fused lookup matmul and one full-width, unmasked store per tile.
    out_ref[...] = jnp.dot(mh, table_ref[...],
                           preferred_element_type=jnp.float32,
                           precision=jax.lax.Precision.HIGHEST)


def _build_stacked_table(tables, pack, v_block):
    """Block-diagonal (pack*F*v_block, pack*total_d) f32 table (single block_diag)."""
    blocks = []
    for _ in range(pack):
        for t in tables:
            t = t.astype(jnp.float32)
            blocks.append(jnp.pad(t, ((0, v_block - t.shape[0]), (0, 0))))
    return jax.scipy.linalg.block_diag(*blocks)


def atom_embedding(atom_features, tables, *, tile_rows=2048):
    """atom_features: [..., F] integer-valued; tables: list of (V_i, D_i) float arrays.

    Returns [prod(leading dims), sum(D_i)] float32.
    """
    n_feat = len(tables)
    vocab = [int(t.shape[0]) for t in tables]
    dims = [int(t.shape[1]) for t in tables]
    total_d = sum(dims)

    # Pack several atoms per output row: lane-dense stores and (on v6e/v7x) a
    # full 256-wide MXU contraction for the lookup matmul.
    if total_d <= 256 and 256 % total_d == 0:
        pack = 256 // total_d
    elif total_d <= 128 and 128 % total_d == 0:
        pack = 128 // total_d
    else:
        pack = 1
    v_block = _round_up(max(vocab), 8)
    n_cols = pack * n_feat                 # C
    k_rows = n_cols * v_block              # K
    out_w = pack * total_d                 # W

    idx = atom_features.astype(jnp.int32).reshape(-1, n_feat)
    n_atoms = idx.shape[0]

    # Clamp out-of-range indices into the valid vocab (nn.Embedding would raise).
    vmax = jnp.asarray(np.asarray(vocab, np.int32) - 1)[None, :]
    idx = jnp.clip(idx, 0, vmax)

    # Pad only to a multiple of pack*8 (sublane alignment of the packed rows);
    # the ragged tail tile of the grid handles any remaining non-divisibility.
    n_pad = _round_up(max(n_atoms, 1), pack * 8)
    if n_pad != n_atoms:
        idx = jnp.pad(idx, ((0, n_pad - n_atoms), (0, 0)))
    rows = n_pad // pack
    idx_packed = idx.reshape(rows, n_cols)

    # Bake the per-column row offset into the indices: packed column c owns rows
    # [c*v_block, (c+1)*v_block) of the stacked table.
    col_off = jnp.asarray(np.arange(n_cols, dtype=np.int32) * v_block)[None, :]
    idx_packed = idx_packed + col_off

    # Static lane-spread matrix S[c, k] = 1 iff k // v_block == c.
    spread_mat = jnp.asarray(
        np.kron(np.eye(n_cols, dtype=np.float32),
                np.ones((1, v_block), np.float32)))

    table = _build_stacked_table(tables, pack, v_block)

    # Tile choice: big tiles amortize the ~0.35us/grid-step overhead; for
    # mid-size inputs target >= 2 grid steps so both v7x TensorCores get work.
    if rows >= 16:
        tile = min(tile_rows, _round_up(pl.cdiv(rows, 2), 8))
    else:
        tile = rows
    grid = (pl.cdiv(rows, tile),)

    out = pl.pallas_call(
        _atom_embedding_kernel,
        out_shape=jax.ShapeDtypeStruct((rows, out_w), jnp.float32),
        grid=grid,
        in_specs=[
            pl.BlockSpec((tile, n_cols), lambda i: (i, 0)),
            pl.BlockSpec((n_cols, k_rows), lambda i: (0, 0)),   # resident spread
            pl.BlockSpec((k_rows, out_w), lambda i: (0, 0)),    # resident table
        ],
        out_specs=pl.BlockSpec((tile, out_w), lambda i: (i, 0)),
        compiler_params=pltpu.CompilerParams(
            dimension_semantics=("parallel",)),
    )(idx_packed, spread_mat, table)

    # Unpack (rows, pack*total_d) -> (N, total_d).  This reshape changes the minor
    # dim (W -> total_d) and costs one XLA relayout pass; consumers that can read
    # the packed layout should use `out` directly instead.
    return out.reshape(rows * pack, total_d)[:n_atoms]


def init_tables(key):
    """Deterministic xavier_normal_-style init for each embedding table."""
    tables = []
    for i, (v, d) in enumerate(zip(ATOM_VOCAB_SIZES, ATOM_EMBED_SIZES)):
        k = jax.random.fold_in(key, i)
        std = (2.0 / (v + d)) ** 0.5
        tables.append(std * jax.random.normal(k, (v, d), dtype=jnp.float32))
    return tables


if __name__ == "__main__":
    key = jax.random.PRNGKey(0)
    k_tab, k_idx = jax.random.split(key)

    tables = init_tables(k_tab)

    # Example input: batch=2, n_atoms=8, n_features=4 (one index per feature).
    batch, n_atoms = 2, 8
    cols = []
    for i, v in enumerate(ATOM_VOCAB_SIZES):
        cols.append(jax.random.randint(jax.random.fold_in(k_idx, i),
                                       (batch, n_atoms), 0, v, dtype=jnp.int32))
    atom_features = jnp.stack(cols, axis=-1)          # [2, 8, 4]

    out = atom_embedding(atom_features, tables)
    out = jax.block_until_ready(out)

    # Pure-JAX reference (same semantics as the PyTorch forward).
    idx_flat = atom_features.reshape(-1, len(tables))
    ref = jnp.concatenate(
        [tables[i][idx_flat[:, i]] for i in range(len(tables))], axis=-1)

    assert out.shape == (batch * n_atoms, TOTAL_EMBED), out.shape
    assert jnp.allclose(out, ref, atol=1e-6), "mismatch vs reference"
    print("KERNEL_OK")
</pallas_src>

<mosaic_0001>
module attributes {stable_mosaic.version = 11 : i64} {
  func.func @_atom_embedding_kernel(%arg0: i32, %arg1: memref<8x32xi32, #tpu.memory_space<vmem>>, %arg2: memref<32x256xf32, #tpu.memory_space<vmem>>, %arg3: memref<256x256xf32, #tpu.memory_space<vmem>>, %arg4: memref<8x256xf32, #tpu.memory_space<vmem>>) attributes {dimension_semantics = [#tpu.dimension_semantics<parallel>], iteration_bounds = array<i64: 1>, scalar_prefetch = 0 : i64, scratch_operands = 0 : i64, tpu.core_type = #tpu.core_type<tc>, window_params = [{transform_indices = @transform_0, window_bounds = array<i64: 8, 32>}, {pipeline_mode = #tpu.pipeline_mode<synchronous>, transform_indices = @transform_1, window_bounds = array<i64: 32, 256>}, {pipeline_mode = #tpu.pipeline_mode<synchronous>, transform_indices = @transform_2, window_bounds = array<i64: 256, 256>}, {transform_indices = @transform_3, window_bounds = array<i64: 8, 256>}]} {
    %c0 = arith.constant 0 : index
    %c0_0 = arith.constant 0 : index
    %0 = vector.load %arg1[%c0, %c0_0] : memref<8x32xi32, #tpu.memory_space<vmem>>, vector<8x32xi32>
    %1 = arith.sitofp %0 : vector<8x32xi32> to vector<8x32xf32>
    %c0_1 = arith.constant 0 : index
    %c0_2 = arith.constant 0 : index
    %2 = vector.load %arg2[%c0_1, %c0_2] : memref<32x256xf32, #tpu.memory_space<vmem>>, vector<32x256xf32>
    %cst = arith.constant dense<0.000000e+00> : vector<8x256xf32>
    %3 = tpu.matmul %1, %2, %cst {dimension_numbers = #tpu.dot_dimension_numbers<[1], [0], [0], [1], [0, 0, 1, 1], [], []>, precision = #tpu.contract_precision<fp32>} : vector<8x32xf32>, vector<32x256xf32>, vector<8x256xf32> -> vector<8x256xf32>
    %4 = tpu.iota {dimensions = array<i32: 1>} : vector<1x256xi32>
    %5 = arith.sitofp %4 : vector<1x256xi32> to vector<1x256xf32>
    %6 = vector.broadcast %5 : vector<1x256xf32> to vector<8x256xf32>
    %7 = arith.cmpf oeq, %3, %6 : vector<8x256xf32>
    %8 = arith.extui %7 : vector<8x256xi1> to vector<8x256xi32>
    %9 = arith.sitofp %8 : vector<8x256xi32> to vector<8x256xf32>
    %c0_3 = arith.constant 0 : index
    %c0_4 = arith.constant 0 : index
    %10 = vector.load %arg3[%c0_3, %c0_4] : memref<256x256xf32, #tpu.memory_space<vmem>>, vector<256x256xf32>
    %cst_5 = arith.constant dense<0.000000e+00> : vector<8x256xf32>
    %11 = tpu.matmul %9, %10, %cst_5 {dimension_numbers = #tpu.dot_dimension_numbers<[1], [0], [0], [1], [0, 0, 1, 1], [], []>, precision = #tpu.contract_precision<fp32>} : vector<8x256xf32>, vector<256x256xf32>, vector<8x256xf32> -> vector<8x256xf32>
    %c0_6 = arith.constant 0 : index
    %c0_7 = arith.constant 0 : index
    %12 = vector.load %arg4[%c0_6, %c0_7] : memref<8x256xf32, #tpu.memory_space<vmem>>, vector<8x256xf32>
    tpu.vector_store %arg4[%c0_6, %c0_7], %11 {strides = array<i32>} : memref<8x256xf32, #tpu.memory_space<vmem>>, vector<8x256xf32>,
    return
  }
  func.func @transform_0(%arg0: i32) -> (i32, i32) {
    %c0_i32 = arith.constant 0 : i32
    %c0_i32_0 = arith.constant 0 : i32
    return %arg0, %c0_i32 : i32, i32
  }
  func.func @transform_1(%arg0: i32) -> (i32, i32) {
    %c0_i32 = arith.constant 0 : i32
    %c0_i32_0 = arith.constant 0 : i32
    %c0_i32_1 = arith.constant 0 : i32
    return %c0_i32, %c0_i32_0 : i32, i32
  }
  func.func @transform_2(%arg0: i32) -> (i32, i32) {
    %c0_i32 = arith.constant 0 : i32
    %c0_i32_0 = arith.constant 0 : i32
    %c0_i32_1 = arith.constant 0 : i32
    return %c0_i32, %c0_i32_0 : i32, i32
  }
  func.func @transform_3(%arg0: i32) -> (i32, i32) {
    %c0_i32 = arith.constant 0 : i32
    %c0_i32_0 = arith.constant 0 : i32
    return %arg0, %c0_i32 : i32, i32
  }
}

</mosaic_0001>

<llo_original>
// kernel: tpu_custom_call.1
$region0: #{tpu_custom_call.1}
  #allocation0 [shape = 'u32[]', space=smem, size = 0x4, offset = 0x4, fixed_abs, tag = 'smem constant byte address 0x4 - core index']
  #allocation1 [shape = 'u32[144,128]{1,0:T(1,128)}', space=vmem, size = 0x12000, scoped, tag = 'internal scratch']
  %s0 = inlined_call_operand.hbm [shape: s32[8,32], index: 0, kind: input, shape index: {}]
  %s1 = inlined_call_operand.hbm [shape: f32[32,256], index: 1, kind: input, shape index: {}]
  %s2 = inlined_call_operand.hbm [shape: f32[256,256], index: 2, kind: input, shape index: {}]
  %s3 = inlined_call_operand.hbm [shape: f32[8,256], index: 3, kind: output, shape index: {}]
  %s4 = sld [smem:[#allocation0]]
  $region34: #{tpu_custom_call.1} parent=0
    _
  %s6 = ssub.s32 1, %s4
  %s7 = scalar_select 0, %s6, %s4
  $region1: #{tpu_custom_call.1} parent=0
    #allocation2 [shape = 'u8[4096]{0}', space=vmem, size = 0x1000, scoped, tag = 'input window, operand 0, single buffered']
    #allocation3 [shape = 's32[1]{0}', space=sflag, size = 0x4, scoped, tag = 'scoped memory for tpu_custom_call.1']
    #allocation4 [shape = 's32[1]{0}', space=sflag, size = 0x4, scoped, tag = 'scoped memory for tpu_custom_call.1']
    #allocation5 [shape = 'u8[32768]{0}', space=vmem, size = 0x8000, scoped, tag = 'input window, operand 1, single buffered']
    #allocation6 [shape = 's32[1]{0}', space=sflag, size = 0x4, scoped, tag = 'scoped memory for tpu_custom_call.1']
    #allocation7 [shape = 'u8[262144]{0}', space=vmem, size = 0x40000, scoped, tag = 'input window, operand 2, single buffered']
    #allocation8 [shape = 'u8[8192]{0}', space=vmem, size = 0x2000, scoped, tag = 'output window, operand 0, single buffered']
    %8 = vsyncpa [#allocation3], 0
    %9 = vsyncpa [#allocation6], 0
    %10 = vsyncpa [#allocation4], 0
    // Predicated region
    $region2: #{tpu_custom_call.1} parent=1 // pred_check
      _
    $region3: #{tpu_custom_call.1} parent=1 // pred_check_branch
      %12 = sbr.rel (0) target = $region5
    $region4: #{tpu_custom_call.1} parent=1 // pred_region
      %s14 = ssub.s32 128, 128
      %15 = vsyncadd [#allocation3], %s14
      %s17 = sshll.u32 [#allocation2], 4
      %s18 = int_to_ptr.vmem [resolvable:$true] %s17
      %20 = dma.hbm_to_vmem [thread:$0]  %s0, 128, %s18, [#allocation3]
    $region5: #{tpu_custom_call.1} parent=1 // pred_fallthru
      _
    // Predicated region
    $region6: #{tpu_custom_call.1} parent=1 // pred_check
      _
    $region7: #{tpu_custom_call.1} parent=1 // pred_check_branch
      %22 = sbr.rel (0) target = $region9
    $region8: #{tpu_custom_call.1} parent=1 // pred_region
      %s24 = ssub.s32 1024, 1024
      %25 = vsyncadd [#allocation6], %s24
      %s26 = sshll.u32 [#allocation5], 4
      %s27 = int_to_ptr.vmem [resolvable:$true] %s26
      %32 = dma.hbm_to_vmem [thread:$0]  %s1, 1024, %s27, [#allocation6], 256, 256, 16
    $region9: #{tpu_custom_call.1} parent=1 // pred_fallthru
      _
    // Predicated region
    $region10: #{tpu_custom_call.1} parent=1 // pred_check
      _
    $region11: #{tpu_custom_call.1} parent=1 // pred_check_branch
      %34 = sbr.rel (0) target = $region13
    $region12: #{tpu_custom_call.1} parent=1 // pred_region
      %s36 = ssub.s32 8192, 8192
      %37 = vsyncadd [#allocation6], %s36
      %s38 = sshll.u32 [#allocation7], 4
      %s39 = int_to_ptr.vmem [resolvable:$true] %s38
      %44 = dma.hbm_to_vmem [thread:$0]  %s2, 8192, %s39, [#allocation6], 256, 256, 16
    $region13: #{tpu_custom_call.1} parent=1 // pred_fallthru
      _
    // Predicated region
    $region14: #{tpu_custom_call.1} parent=1 // pred_check
      _
    $region15: #{tpu_custom_call.1} parent=1 // pred_check_branch
      %46 = sbr.rel (0) target = $region17
    $region16: #{tpu_custom_call.1} parent=1 // pred_region
      %47 = dma.done [#allocation3], 128
    $region17: #{tpu_custom_call.1} parent=1 // pred_fallthru
      _
    // Predicated region
    $region18: #{tpu_custom_call.1} parent=1 // pred_check
      _
    $region19: #{tpu_custom_call.1} parent=1 // pred_check_branch
      %49 = sbr.rel (0) target = $region21
    $region20: #{tpu_custom_call.1} parent=1 // pred_region
      %50 = dma.done [#allocation6], 1024
    $region21: #{tpu_custom_call.1} parent=1 // pred_fallthru
      _
    // Predicated region
    $region22: #{tpu_custom_call.1} parent=1 // pred_check
      _
    $region23: #{tpu_custom_call.1} parent=1 // pred_check_branch
      %52 = sbr.rel (0) target = $region25
    $region24: #{tpu_custom_call.1} parent=1 // pred_region
      %53 = dma.done [#allocation6], 8192
    $region25: #{tpu_custom_call.1} parent=1 // pred_fallthru
      _
    %v54 = vld [vmem:[#allocation2] sm:$0xff]
    %v55 = vcvt.s32.f32 %v54
    %v56 = vld [vmem:[#allocation5] sm:$0xff]
    %v57 = vld [vmem:[#allocation5 + $0x8] sm:$0xff]
    %v58 = vld [vmem:[#allocation5 + $0x10] sm:$0xff]
    %v59 = vld [vmem:[#allocation5 + $0x18] sm:$0xff]
    %v60 = vld [vmem:[#allocation5 + $0x20] sm:$0xff]
    %v61 = vld [vmem:[#allocation5 + $0x28] sm:$0xff]
    %v62 = vld [vmem:[#allocation5 + $0x30] sm:$0xff]
    %v63 = vld [vmem:[#allocation5 + $0x38] sm:$0xff]
    %vm64 = vcmask 261120
    %v66 = vsel %vm64, %v55, 0
    %v68 = vand.u32 %v57, 4294901760
    %69 = vmatprep.subr.mxu0 %v68
    %v70 = vand.u32 %v56, 4294901760
    %71 = vmatpush1.msra.mxu0 %v70
    %v72 = vand.u32 %v59, 4294901760
    %73 = vmatprep.subr.mxu0 %v72
    %v74 = vand.u32 %v58, 4294901760
    %75 = vmatpush1.msra.mxu0 %v74
    %v76 = vand.u32 %v61, 4294901760
    %77 = vmatprep.subr.mxu0 %v76
    %v78 = vand.u32 %v60, 4294901760
    %79 = vmatpush1.msra.mxu0 %v78
    %v80 = vand.u32 %v63, 4294901760
    %81 = vmatprep.subr.mxu0 %v80
    %v82 = vand.u32 %v62, 4294901760
    %83 = vmatpush1.msra.mxu0 %v82
    %84 = vmatprep.subr.mxu0 0.0
    %85 = vmatpush1.msra.mxu0 0.0
    %86 = vmatprep.subr.mxu0 0.0
    %87 = vmatpush1.msra.mxu0 0.0
    %88 = vmatprep.subr.mxu0 0.0
    %89 = vmatpush1.msra.mxu0 0.0
    %90 = vmatprep.subr.mxu0 0.0
    %91 = vmatpush1.msra.mxu0 0.0
    %92 = vmatprep.subr.mxu0 0.0
    %93 = vmatpush1.msra.mxu0 0.0
    %94 = vmatprep.subr.mxu0 0.0
    %95 = vmatpush1.msra.mxu0 0.0
    %96 = vmatprep.subr.mxu0 0.0
    %97 = vmatpush1.msra.mxu0 0.0
    %98 = vmatprep.subr.mxu0 0.0
    %99 = vmatpush1.msra.mxu0 0.0
    %100 = vmatprep.subr.mxu0 0.0
    %101 = vmatpush1.msra.mxu0 0.0
    %102 = vmatprep.subr.mxu0 0.0
    %103 = vmatpush1.msra.mxu0 0.0
    %104 = vmatprep.subr.mxu0 0.0
    %105 = vmatpush1.msra.mxu0 0.0
    %106 = vmatprep.subr.mxu0 0.0
    %107 = vmatpush1.msra.mxu0 0.0
    %108 = vmatprep.subr.mxu0 0.0
    %109 = vmatpush1.msra.mxu0 0.0
    %110 = vmatprep.subr.mxu0 0.0
    %111 = vmatpush1.msra.mxu0 0.0
    %112 = vmatprep.subr.mxu0 0.0
    %113 = vmatpush1.msra.mxu0 0.0
    %114 = vmatprep.subr.mxu0 0.0
    %115 = vmatpush1.msra.mxu0 0.0
    %116 = vmatprep.subr.mxu0 0.0
    %117 = vmatpush1.msra.mxu0 0.0
    %118 = vmatprep.subr.mxu0 0.0
    %119 = vmatpush1.msra.mxu0 0.0
    %120 = vmatprep.subr.mxu0 0.0
    %121 = vmatpush1.msra.mxu0 0.0
    %122 = vmatprep.subr.mxu0 0.0
    %123 = vmatpush1.msra.mxu0 0.0
    %124 = vmatprep.subr.mxu0 0.0
    %125 = vmatpush1.msra.mxu0 0.0
    %126 = vmatprep.subr.mxu0 0.0
    %127 = vmatpush1.msra.mxu0 0.0
    %128 = vmatprep.subr.mxu0 0.0
    %129 = vmatpush1.msra.mxu0 0.0
    %130 = vmatprep.subr.mxu0 0.0
    %131 = vmatpush1.msra.mxu0 0.0
    %132 = vmatprep.subr.mxu0 0.0
    %133 = vmatpush1.msra.mxu0 0.0
    %134 = vmatprep.subr.mxu0 0.0
    %135 = vmatpush1.msra.mxu0 0.0
    %136 = vmatprep.subr.mxu0 0.0
    %137 = vmatpush1.msra.mxu0 0.0
    %138 = vmatprep.subr.mxu0 0.0
    %139 = vmatpush1.msra.mxu0 0.0
    %140 = vmatprep.mubr.f32.mxu0 0.0
    %v141 = vand.u32 %v66, 4294901760
    %v142 = vsub.f32 %v66, %v141
    %v143 = vand.u32 %v142, 4294901760
    %v144 = vsub.f32 %v142, %v143
    %v145 = vand.u32 %v144, 4294901760
    %146 = vmatmul.mubr.f32.gmra.mrb[0].mxu0 %v145
    %v147 = vpop.f32.mrb[0].mxu0
    %v148 = vadd.f32 0.0, %v147
    %v149 = vpop.f32.mrb[0].mxu0
    %v150 = vadd.f32 0.0, %v149
    %151 = vdwg.mxu0
    %v152 = vand.u32 %v57, 4294901760
    %v153 = vsub.f32 %v57, %v152
    %v154 = vand.u32 %v153, 4294901760
    %v155 = vsub.f32 %v153, %v154
    %v156 = vand.u32 %v155, 4294901760
    %157 = vmatprep.subr.mxu0 %v156
    %v158 = vand.u32 %v56, 4294901760
    %v159 = vsub.f32 %v56, %v158
    %v160 = vand.u32 %v159, 4294901760
    %v161 = vsub.f32 %v159, %v160
    %v162 = vand.u32 %v161, 4294901760
    %163 = vmatpush1.msra.mxu0 %v162
    %v164 = vand.u32 %v59, 4294901760
    %v165 = vsub.f32 %v59, %v164
    %v166 = vand.u32 %v165, 4294901760
    %v167 = vsub.f32 %v165, %v166
    %v168 = vand.u32 %v167, 4294901760
    %169 = vmatprep.subr.mxu0 %v168
    %v170 = vand.u32 %v58, 4294901760
    %v171 = vsub.f32 %v58, %v170
    %v172 = vand.u32 %v171, 4294901760
    %v173 = vsub.f32 %v171, %v172
    %v174 = vand.u32 %v173, 4294901760
    %175 = vmatpush1.msra.mxu0 %v174
    %v176 = vand.u32 %v61, 4294901760
    %v177 = vsub.f32 %v61, %v176
    %v178 = vand.u32 %v177, 4294901760
    %v179 = vsub.f32 %v177, %v178
    %v180 = vand.u32 %v179, 4294901760
    %181 = vmatprep.subr.mxu0 %v180
    %v182 = vand.u32 %v60, 4294901760
    %v183 = vsub.f32 %v60, %v182
    %v184 = vand.u32 %v183, 4294901760
    %v185 = vsub.f32 %v183, %v184
    %v186 = vand.u32 %v185, 4294901760
    %187 = vmatpush1.msra.mxu0 %v186
    %v188 = vand.u32 %v63, 4294901760
    %v189 = vsub.f32 %v63, %v188
    %v190 = vand.u32 %v189, 4294901760
    %v191 = vsub.f32 %v189, %v190
    %v192 = vand.u32 %v191, 4294901760
    %193 = vmatprep.subr.mxu0 %v192
    %v194 = vand.u32 %v62, 4294901760
    %v195 = vsub.f32 %v62, %v194
    %v196 = vand.u32 %v195, 4294901760
    %v197 = vsub.f32 %v195, %v196
    %v198 = vand.u32 %v197, 4294901760
    %199 = vmatpush1.msra.mxu0 %v198
    %200 = vmatprep.subr.mxu0 0.0
    %201 = vmatpush1.msra.mxu0 0.0
    %202 = vmatprep.subr.mxu0 0.0
    %203 = vmatpush1.msra.mxu0 0.0
    %204 = vmatprep.subr.mxu0 0.0
    %205 = vmatpush1.msra.mxu0 0.0
    %206 = vmatprep.subr.mxu0 0.0
    %207 = vmatpush1.msra.mxu0 0.0
    %208 = vmatprep.subr.mxu0 0.0
    %209 = vmatpush1.msra.mxu0 0.0
    %210 = vmatprep.subr.mxu0 0.0
    %211 = vmatpush1.msra.mxu0 0.0
    %212 = vmatprep.subr.mxu0 0.0
    %213 = vmatpush1.msra.mxu0 0.0
    %214 = vmatprep.subr.mxu0 0.0
    %215 = vmatpush1.msra.mxu0 0.0
    %216 = vmatprep.subr.mxu0 0.0
    %217 = vmatpush1.msra.mxu0 0.0
    %218 = vmatprep.subr.mxu0 0.0
    %219 = vmatpush1.msra.mxu0 0.0
    %220 = vmatprep.subr.mxu0 0.0
    %221 = vmatpush1.msra.mxu0 0.0
    %222 = vmatprep.subr.mxu0 0.0
    %223 = vmatpush1.msra.mxu0 0.0
    %224 = vmatprep.subr.mxu0 0.0
    %225 = vmatpush1.msra.mxu0 0.0
    %226 = vmatprep.subr.mxu0 0.0
    %227 = vmatpush1.msra.mxu0 0.0
    %228 = vmatprep.subr.mxu0 0.0
    %229 = vmatpush1.msra.mxu0 0.0
    %230 = vmatprep.subr.mxu0 0.0
    %231 = vmatpush1.msra.mxu0 0.0
    %232 = vmatprep.subr.mxu0 0.0
    %233 = vmatpush1.msra.mxu0 0.0
    %234 = vmatprep.subr.mxu0 0.0
    %235 = vmatpush1.msra.mxu0 0.0
    %236 = vmatprep.subr.mxu0 0.0
    %237 = vmatpush1.msra.mxu0 0.0
    %238 = vmatprep.subr.mxu0 0.0
    %239 = vmatpush1.msra.mxu0 0.0
    %240 = vmatprep.subr.mxu0 0.0
    %241 = vmatpush1.msra.mxu0 0.0
    %242 = vmatprep.subr.mxu0 0.0
    %243 = vmatpush1.msra.mxu0 0.0
    %244 = vmatprep.subr.mxu0 0.0
    %245 = vmatpush1.msra.mxu0 0.0
    %246 = vmatprep.subr.mxu0 0.0
    %247 = vmatpush1.msra.mxu0 0.0
    %248 = vmatprep.subr.mxu0 0.0
    %249 = vmatpush1.msra.mxu0 0.0
    %250 = vmatprep.subr.mxu0 0.0
    %251 = vmatpush1.msra.mxu0 0.0
    %252 = vmatprep.subr.mxu0 0.0
    %253 = vmatpush1.msra.mxu0 0.0
    %254 = vmatprep.subr.mxu0 0.0
    %255 = vmatpush1.msra.mxu0 0.0
    %256 = vmatprep.mubr.f32.mxu0 0.0
    %v257 = vand.u32 %v66, 4294901760
    %258 = vmatmul.mubr.f32.gmra.mrb[0].mxu0 %v257
    %v259 = vpop.f32.mrb[0].mxu0
    %v260 = vadd.f32 %v148, %v259
    %v261 = vpop.f32.mrb[0].mxu0
    %v262 = vadd.f32 %v150, %v261
    %263 = vdwg.mxu0
    %v264 = vand.u32 %v57, 4294901760
    %v265 = vsub.f32 %v57, %v264
    %266 = vmatprep.subr.mxu0 %v265
    %v267 = vand.u32 %v56, 4294901760
    %v268 = vsub.f32 %v56, %v267
    %269 = vmatpush1.msra.mxu0 %v268
    %v270 = vand.u32 %v59, 4294901760
    %v271 = vsub.f32 %v59, %v270
    %272 = vmatprep.subr.mxu0 %v271
    %v273 = vand.u32 %v58, 4294901760
    %v274 = vsub.f32 %v58, %v273
    %275 = vmatpush1.msra.mxu0 %v274
    %v276 = vand.u32 %v61, 4294901760
    %v277 = vsub.f32 %v61, %v276
    %278 = vmatprep.subr.mxu0 %v277
    %v279 = vand.u32 %v60, 4294901760
    %v280 = vsub.f32 %v60, %v279
    %281 = vmatpush1.msra.mxu0 %v280
    %v282 = vand.u32 %v63, 4294901760
    %v283 = vsub.f32 %v63, %v282
    %284 = vmatprep.subr.mxu0 %v283
    %v285 = vand.u32 %v62, 4294901760
    %v286 = vsub.f32 %v62, %v285
    %287 = vmatpush1.msra.mxu0 %v286
    %288 = vmatprep.subr.mxu0 0.0
    %289 = vmatpush1.msra.mxu0 0.0
    %290 = vmatprep.subr.mxu0 0.0
    %291 = vmatpush1.msra.mxu0 0.0
    %292 = vmatprep.subr.mxu0 0.0
    %293 = vmatpush1.msra.mxu0 0.0
    %294 = vmatprep.subr.mxu0 0.0
    %295 = vmatpush1.msra.mxu0 0.0
    %296 = vmatprep.subr.mxu0 0.0
    %297 = vmatpush1.msra.mxu0 0.0
    %298 = vmatprep.subr.mxu0 0.0
    %299 = vmatpush1.msra.mxu0 0.0
    %300 = vmatprep.subr.mxu0 0.0
    %301 = vmatpush1.msra.mxu0 0.0
    %302 = vmatprep.subr.mxu0 0.0
    %303 = vmatpush1.msra.mxu0 0.0
    %304 = vmatprep.subr.mxu0 0.0
    %305 = vmatpush1.msra.mxu0 0.0
    %306 = vmatprep.subr.mxu0 0.0
    %307 = vmatpush1.msra.mxu0 0.0
    %308 = vmatprep.subr.mxu0 0.0
    %309 = vmatpush1.msra.mxu0 0.0
    %310 = vmatprep.subr.mxu0 0.0
    %311 = vmatpush1.msra.mxu0 0.0
    %312 = vmatprep.subr.mxu0 0.0
    %313 = vmatpush1.msra.mxu0 0.0
    %314 = vmatprep.subr.mxu0 0.0
    %315 = vmatpush1.msra.mxu0 0.0
    %316 = vmatprep.subr.mxu0 0.0
    %317 = vmatpush1.msra.mxu0 0.0
    %318 = vmatprep.subr.mxu0 0.0
    %319 = vmatpush1.msra.mxu0 0.0
    %320 = vmatprep.subr.mxu0 0.0
    %321 = vmatpush1.msra.mxu0 0.0
    %322 = vmatprep.subr.mxu0 0.0
    %323 = vmatpush1.msra.mxu0 0.0
    %324 = vmatprep.subr.mxu0 0.0
    %325 = vmatpush1.msra.mxu0 0.0
    %326 = vmatprep.subr.mxu0 0.0
    %327 = vmatpush1.msra.mxu0 0.0
    %328 = vmatprep.subr.mxu0 0.0
    %329 = vmatpush1.msra.mxu0 0.0
    %330 = vmatprep.subr.mxu0 0.0
    %331 = vmatpush1.msra.mxu0 0.0
    %332 = vmatprep.subr.mxu0 0.0
    %333 = vmatpush1.msra.mxu0 0.0
    %334 = vmatprep.subr.mxu0 0.0
    %335 = vmatpush1.msra.mxu0 0.0
    %336 = vmatprep.subr.mxu0 0.0
    %337 = vmatpush1.msra.mxu0 0.0
    %338 = vmatprep.subr.mxu0 0.0
    %339 = vmatpush1.msra.mxu0 0.0
    %340 = vmatprep.subr.mxu0 0.0
    %341 = vmatpush1.msra.mxu0 0.0
    %342 = vmatprep.subr.mxu0 0.0
    %343 = vmatpush1.msra.mxu0 0.0
    %344 = vmatprep.mubr.f32.mxu0 0.0
    %v345 = vand.u32 %v66, 4294901760
    %v346 = vsub.f32 %v66, %v345
    %347 = vmatmul.mubr.f32.gmra.mrb[0].mxu0 %v346
    %v348 = vpop.f32.mrb[0].mxu0
    %v349 = vadd.f32 %v260, %v348
    %v350 = vpop.f32.mrb[0].mxu0
    %v351 = vadd.f32 %v262, %v350
    %352 = vdwg.mxu0
    %v353 = vand.u32 %v57, 4294901760
    %354 = vmatprep.subr.mxu0 %v353
    %v355 = vand.u32 %v56, 4294901760
    %356 = vmatpush1.msra.mxu0 %v355
    %v357 = vand.u32 %v59, 4294901760
    %358 = vmatprep.subr.mxu0 %v357
    %v359 = vand.u32 %v58, 4294901760
    %360 = vmatpush1.msra.mxu0 %v359
    %v361 = vand.u32 %v61, 4294901760
    %362 = vmatprep.subr.mxu0 %v361
    %v363 = vand.u32 %v60, 4294901760
    %364 = vmatpush1.msra.mxu0 %v363
    %v365 = vand.u32 %v63, 4294901760
    %366 = vmatprep.subr.mxu0 %v365
    %v367 = vand.u32 %v62, 4294901760
    %368 = vmatpush1.msra.mxu0 %v367
    %369 = vmatprep.subr.mxu0 0.0
    %370 = vmatpush1.msra.mxu0 0.0
    %371 = vmatprep.subr.mxu0 0.0
    %372 = vmatpush1.msra.mxu0 0.0
    %373 = vmatprep.subr.mxu0 0.0
    %374 = vmatpush1.msra.mxu0 0.0
    %375 = vmatprep.subr.mxu0 0.0
    %376 = vmatpush1.msra.mxu0 0.0
    %377 = vmatprep.subr.mxu0 0.0
    %378 = vmatpush1.msra.mxu0 0.0
    %379 = vmatprep.subr.mxu0 0.0
    %380 = vmatpush1.msra.mxu0 0.0
    %381 = vmatprep.subr.mxu0 0.0
    %382 = vmatpush1.msra.mxu0 0.0
    %383 = vmatprep.subr.mxu0 0.0
    %384 = vmatpush1.msra.mxu0 0.0
    %385 = vmatprep.subr.mxu0 0.0
    %386 = vmatpush1.msra.mxu0 0.0
    %387 = vmatprep.subr.mxu0 0.0
    %388 = vmatpush1.msra.mxu0 0.0
    %389 = vmatprep.subr.mxu0 0.0
    %390 = vmatpush1.msra.mxu0 0.0
    %391 = vmatprep.subr.mxu0 0.0
    %392 = vmatpush1.msra.mxu0 0.0
    %393 = vmatprep.subr.mxu0 0.0
    %394 = vmatpush1.msra.mxu0 0.0
    %395 = vmatprep.subr.mxu0 0.0
    %396 = vmatpush1.msra.mxu0 0.0
    %397 = vmatprep.subr.mxu0 0.0
    %398 = vmatpush1.msra.mxu0 0.0
    %399 = vmatprep.subr.mxu0 0.0
    %400 = vmatpush1.msra.mxu0 0.0
    %401 = vmatprep.subr.mxu0 0.0
    %402 = vmatpush1.msra.mxu0 0.0
    %403 = vmatprep.subr.mxu0 0.0
    %404 = vmatpush1.msra.mxu0 0.0
    %405 = vmatprep.subr.mxu0 0.0
    %406 = vmatpush1.msra.mxu0 0.0
    %407 = vmatprep.subr.mxu0 0.0
    %408 = vmatpush1.msra.mxu0 0.0
    %409 = vmatprep.subr.mxu0 0.0
    %410 = vmatpush1.msra.mxu0 0.0
    %411 = vmatprep.subr.mxu0 0.0
    %412 = vmatpush1.msra.mxu0 0.0
    %413 = vmatprep.subr.mxu0 0.0
    %414 = vmatpush1.msra.mxu0 0.0
    %415 = vmatprep.subr.mxu0 0.0
    %416 = vmatpush1.msra.mxu0 0.0
    %417 = vmatprep.subr.mxu0 0.0
    %418 = vmatpush1.msra.mxu0 0.0
    %419 = vmatprep.subr.mxu0 0.0
    %420 = vmatpush1.msra.mxu0 0.0
    %421 = vmatprep.subr.mxu0 0.0
    %422 = vmatpush1.msra.mxu0 0.0
    %423 = vmatprep.subr.mxu0 0.0
    %424 = vmatpush1.msra.mxu0 0.0
    %425 = vmatprep.mubr.f32.mxu0 0.0
    %v426 = vand.u32 %v66, 4294901760
    %v427 = vsub.f32 %v66, %v426
    %v428 = vand.u32 %v427, 4294901760
    %429 = vmatmul.mubr.f32.gmra.mrb[0].mxu0 %v428
    %v430 = vpop.f32.mrb[0].mxu0
    %v431 = vadd.f32 %v349, %v430
    %v432 = vpop.f32.mrb[0].mxu0
    %v433 = vadd.f32 %v351, %v432
    %434 = vdwg.mxu0
    %v435 = vand.u32 %v57, 4294901760
    %v436 = vsub.f32 %v57, %v435
    %v437 = vand.u32 %v436, 4294901760
    %438 = vmatprep.subr.mxu0 %v437
    %v439 = vand.u32 %v56, 4294901760
    %v440 = vsub.f32 %v56, %v439
    %v441 = vand.u32 %v440, 4294901760
    %442 = vmatpush1.msra.mxu0 %v441
    %v443 = vand.u32 %v59, 4294901760
    %v444 = vsub.f32 %v59, %v443
    %v445 = vand.u32 %v444, 4294901760
    %446 = vmatprep.subr.mxu0 %v445
    %v447 = vand.u32 %v58, 4294901760
    %v448 = vsub.f32 %v58, %v447
    %v449 = vand.u32 %v448, 4294901760
    %450 = vmatpush1.msra.mxu0 %v449
    %v451 = vand.u32 %v61, 4294901760
    %v452 = vsub.f32 %v61, %v451
    %v453 = vand.u32 %v452, 4294901760
    %454 = vmatprep.subr.mxu0 %v453
    %v455 = vand.u32 %v60, 4294901760
    %v456 = vsub.f32 %v60, %v455
    %v457 = vand.u32 %v456, 4294901760
    %458 = vmatpush1.msra.mxu0 %v457
    %v459 = vand.u32 %v63, 4294901760
    %v460 = vsub.f32 %v63, %v459
    %v461 = vand.u32 %v460, 4294901760
    %462 = vmatprep.subr.mxu0 %v461
    %v463 = vand.u32 %v62, 4294901760
    %v464 = vsub.f32 %v62, %v463
    %v465 = vand.u32 %v464, 4294901760
    %466 = vmatpush1.msra.mxu0 %v465
    %467 = vmatprep.subr.mxu0 0.0
    %468 = vmatpush1.msra.mxu0 0.0
    %469 = vmatprep.subr.mxu0 0.0
    %470 = vmatpush1.msra.mxu0 0.0
    %471 = vmatprep.subr.mxu0 0.0
    %472 = vmatpush1.msra.mxu0 0.0
    %473 = vmatprep.subr.mxu0 0.0
    %474 = vmatpush1.msra.mxu0 0.0
    %475 = vmatprep.subr.mxu0 0.0
    %476 = vmatpush1.msra.mxu0 0.0
    %477 = vmatprep.subr.mxu0 0.0
    %478 = vmatpush1.msra.mxu0 0.0
    %479 = vmatprep.subr.mxu0 0.0
    %480 = vmatpush1.msra.mxu0 0.0
    %481 = vmatprep.subr.mxu0 0.0
    %482 = vmatpush1.msra.mxu0 0.0
    %483 = vmatprep.subr.mxu0 0.0
    %484 = vmatpush1.msra.mxu0 0.0
    %485 = vmatprep.subr.mxu0 0.0
    %486 = vmatpush1.msra.mxu0 0.0
    %487 = vmatprep.subr.mxu0 0.0
    %488 = vmatpush1.msra.mxu0 0.0
    %489 = vmatprep.subr.mxu0 0.0
    %490 = vmatpush1.msra.mxu0 0.0
    %491 = vmatprep.subr.mxu0 0.0
    %492 = vmatpush1.msra.mxu0 0.0
    %493 = vmatprep.subr.mxu0 0.0
    %494 = vmatpush1.msra.mxu0 0.0
    %495 = vmatprep.subr.mxu0 0.0
    %496 = vmatpush1.msra.mxu0 0.0
    %497 = vmatprep.subr.mxu0 0.0
    %498 = vmatpush1.msra.mxu0 0.0
    %499 = vmatprep.subr.mxu0 0.0
    %500 = vmatpush1.msra.mxu0 0.0
    %501 = vmatprep.subr.mxu0 0.0
    %502 = vmatpush1.msra.mxu0 0.0
    %503 = vmatprep.subr.mxu0 0.0
    %504 = vmatpush1.msra.mxu0 0.0
    %505 = vmatprep.subr.mxu0 0.0
    %506 = vmatpush1.msra.mxu0 0.0
    %507 = vmatprep.subr.mxu0 0.0
    %508 = vmatpush1.msra.mxu0 0.0
    %509 = vmatprep.subr.mxu0 0.0
    %510 = vmatpush1.msra.mxu0 0.0
    %511 = vmatprep.subr.mxu0 0.0
    %512 = vmatpush1.msra.mxu0 0.0
    %513 = vmatprep.subr.mxu0 0.0
    %514 = vmatpush1.msra.mxu0 0.0
    %515 = vmatprep.subr.mxu0 0.0
    %516 = vmatpush1.msra.mxu0 0.0
    %517 = vmatprep.subr.mxu0 0.0
    %518 = vmatpush1.msra.mxu0 0.0
    %519 = vmatprep.subr.mxu0 0.0
    %520 = vmatpush1.msra.mxu0 0.0
    %521 = vmatprep.subr.mxu0 0.0
    %522 = vmatpush1.msra.mxu0 0.0
    %523 = vmatprep.mubr.f32.mxu0 0.0
    %v524 = vand.u32 %v66, 4294901760
    %525 = vmatmul.mubr.f32.gmra.mrb[0].mxu0 %v524
    %v526 = vpop.f32.mrb[0].mxu0
    %v527 = vadd.f32 %v431, %v526
    %v528 = vpop.f32.mrb[0].mxu0
    %v529 = vadd.f32 %v433, %v528
    %530 = vdwg.mxu0
    %v531 = vand.u32 %v57, 4294901760
    %532 = vmatprep.subr.mxu0 %v531
    %v533 = vand.u32 %v56, 4294901760
    %534 = vmatpush1.msra.mxu0 %v533
    %v535 = vand.u32 %v59, 4294901760
    %536 = vmatprep.subr.mxu0 %v535
    %v537 = vand.u32 %v58, 4294901760
    %538 = vmatpush1.msra.mxu0 %v537
    %v539 = vand.u32 %v61, 4294901760
    %540 = vmatprep.subr.mxu0 %v539
    %v541 = vand.u32 %v60, 4294901760
    %542 = vmatpush1.msra.mxu0 %v541
    %v543 = vand.u32 %v63, 4294901760
    %544 = vmatprep.subr.mxu0 %v543
    %v545 = vand.u32 %v62, 4294901760
    %546 = vmatpush1.msra.mxu0 %v545
    %547 = vmatprep.subr.mxu0 0.0
    %548 = vmatpush1.msra.mxu0 0.0
    %549 = vmatprep.subr.mxu0 0.0
    %550 = vmatpush1.msra.mxu0 0.0
    %551 = vmatprep.subr.mxu0 0.0
    %552 = vmatpush1.msra.mxu0 0.0
    %553 = vmatprep.subr.mxu0 0.0
    %554 = vmatpush1.msra.mxu0 0.0
    %555 = vmatprep.subr.mxu0 0.0
    %556 = vmatpush1.msra.mxu0 0.0
    %557 = vmatprep.subr.mxu0 0.0
    %558 = vmatpush1.msra.mxu0 0.0
    %559 = vmatprep.subr.mxu0 0.0
    %560 = vmatpush1.msra.mxu0 0.0
    %561 = vmatprep.subr.mxu0 0.0
    %562 = vmatpush1.msra.mxu0 0.0
    %563 = vmatprep.subr.mxu0 0.0
    %564 = vmatpush1.msra.mxu0 0.0
    %565 = vmatprep.subr.mxu0 0.0
    %566 = vmatpush1.msra.mxu0 0.0
    %567 = vmatprep.subr.mxu0 0.0
    %568 = vmatpush1.msra.mxu0 0.0
    %569 = vmatprep.subr.mxu0 0.0
    %570 = vmatpush1.msra.mxu0 0.0
    %571 = vmatprep.subr.mxu0 0.0
    %572 = vmatpush1.msra.mxu0 0.0
    %573 = vmatprep.subr.mxu0 0.0
    %574 = vmatpush1.msra.mxu0 0.0
    %575 = vmatprep.subr.mxu0 0.0
    %576 = vmatpush1.msra.mxu0 0.0
    %577 = vmatprep.subr.mxu0 0.0
    %578 = vmatpush1.msra.mxu0 0.0
    %579 = vmatprep.subr.mxu0 0.0
    %580 = vmatpush1.msra.mxu0 0.0
    %581 = vmatprep.subr.mxu0 0.0
    %582 = vmatpush1.msra.mxu0 0.0
    %583 = vmatprep.subr.mxu0 0.0
    %584 = vmatpush1.msra.mxu0 0.0
    %585 = vmatprep.subr.mxu0 0.0
    %586 = vmatpush1.msra.mxu0 0.0
    %587 = vmatprep.subr.mxu0 0.0
    %588 = vmatpush1.msra.mxu0 0.0
    %589 = vmatprep.subr.mxu0 0.0
    %590 = vmatpush1.msra.mxu0 0.0
    %591 = vmatprep.subr.mxu0 0.0
    %592 = vmatpush1.msra.mxu0 0.0
    %593 = vmatprep.subr.mxu0 0.0
    %594 = vmatpush1.msra.mxu0 0.0
    %595 = vmatprep.subr.mxu0 0.0
    %596 = vmatpush1.msra.mxu0 0.0
    %597 = vmatprep.subr.mxu0 0.0
    %598 = vmatpush1.msra.mxu0 0.0
    %599 = vmatprep.subr.mxu0 0.0
    %600 = vmatpush1.msra.mxu0 0.0
    %601 = vmatprep.subr.mxu0 0.0
    %602 = vmatpush1.msra.mxu0 0.0
    %603 = vmatprep.mubr.f32.mxu0 0.0
    %v604 = vand.u32 %v66, 4294901760
    %605 = vmatmul.mubr.f32.gmra.mrb[0].mxu0 %v604
    %v606 = vpop.f32.mrb[0].mxu0
    %v607 = vadd.f32 %v527, %v606
    %v608 = vpop.f32.mrb[0].mxu0
    %v609 = vadd.f32 %v529, %v608
    %610 = vdwg.mxu0
    %v611 = vlaneseq
    %v612 = vand.u32 %v611, 127
    %v613 = vadd.s32 %v612, 128
    %v614 = vcvt.s32.f32 %v612
    %v615 = vcvt.s32.f32 %v613
    %vm616 = vcmp.eq.f32.partialorder %v607, %v614
    %vm617 = vcmp.eq.f32.partialorder %v609, %v615
    %v618 = vsel %vm616, 1, 0
    %v619 = vsel %vm617, 1, 0
    %v620 = vcvt.s32.f32 %v618
    %v621 = vcvt.s32.f32 %v619
    %v622 = vld [vmem:[#allocation7] sm:$0xff]
    %v623 = vld [vmem:[#allocation7 + $0x8] sm:$0xff]
    %v624 = vld [vmem:[#allocation7 + $0x10] sm:$0xff]
    %v625 = vld [vmem:[#allocation7 + $0x18] sm:$0xff]
    %v626 = vld [vmem:[#allocation7 + $0x20] sm:$0xff]
    %v627 = vld [vmem:[#allocation7 + $0x28] sm:$0xff]
    %v628 = vld [vmem:[#allocation7 + $0x30] sm:$0xff]
    %v629 = vld [vmem:[#allocation7 + $0x38] sm:$0xff]
    %v630 = vld [vmem:[#allocation7 + $0x40] sm:$0xff]
    %v631 = vld [vmem:[#allocation7 + $0x48] sm:$0xff]
    %v632 = vld [vmem:[#allocation7 + $0x50] sm:$0xff]
    %v633 = vld [vmem:[#allocation7 + $0x58] sm:$0xff]
    %v634 = vld [vmem:[#allocation7 + $0x60] sm:$0xff]
    %v635 = vld [vmem:[#allocation7 + $0x68] sm:$0xff]
    %v636 = vld [vmem:[#allocation7 + $0x70] sm:$0xff]
    %v637 = vld [vmem:[#allocation7 + $0x78] sm:$0xff]
    %v638 = vld [vmem:[#allocation7 + $0x80] sm:$0xff]
    %v639 = vld [vmem:[#allocation7 + $0x88] sm:$0xff]
    %v640 = vld [vmem:[#allocation7 + $0x90] sm:$0xff]
    %v641 = vld [vmem:[#allocation7 + $0x98] sm:$0xff]
    %v642 = vld [vmem:[#allocation7 + $0xa0] sm:$0xff]
    %v643 = vld [vmem:[#allocation7 + $0xa8] sm:$0xff]
    %v644 = vld [vmem:[#allocation7 + $0xb0] sm:$0xff]
    %v645 = vld [vmem:[#allocation7 + $0xb8] sm:$0xff]
    %v646 = vld [vmem:[#allocation7 + $0xc0] sm:$0xff]
    %v647 = vld [vmem:[#allocation7 + $0xc8] sm:$0xff]
    %v648 = vld [vmem:[#allocation7 + $0xd0] sm:$0xff]
    %v649 = vld [vmem:[#allocation7 + $0xd8] sm:$0xff]
    %v650 = vld [vmem:[#allocation7 + $0xe0] sm:$0xff]
    %v651 = vld [vmem:[#allocation7 + $0xe8] sm:$0xff]
    %v652 = vld [vmem:[#allocation7 + $0xf0] sm:$0xff]
    %v653 = vld [vmem:[#allocation7 + $0xf8] sm:$0xff]
    %v654 = vld [vmem:[#allocation7 + $0x100] sm:$0xff]
    %v655 = vld [vmem:[#allocation7 + $0x108] sm:$0xff]
    %v656 = vld [vmem:[#allocation7 + $0x110] sm:$0xff]
    %v657 = vld [vmem:[#allocation7 + $0x118] sm:$0xff]
    %v658 = vld [vmem:[#allocation7 + $0x120] sm:$0xff]
    %v659 = vld [vmem:[#allocation7 + $0x128] sm:$0xff]
    %v660 = vld [vmem:[#allocation7 + $0x130] sm:$0xff]
    %v661 = vld [vmem:[#allocation7 + $0x138] sm:$0xff]
    %v662 = vld [vmem:[#allocation7 + $0x140] sm:$0xff]
    %v663 = vld [vmem:[#allocation7 + $0x148] sm:$0xff]
    %v664 = vld [vmem:[#allocation7 + $0x150] sm:$0xff]
    %v665 = vld [vmem:[#allocation7 + $0x158] sm:$0xff]
    %v666 = vld [vmem:[#allocation7 + $0x160] sm:$0xff]
    %v667 = vld [vmem:[#allocation7 + $0x168] sm:$0xff]
    %v668 = vld [vmem:[#allocation7 + $0x170] sm:$0xff]
    %v669 = vld [vmem:[#allocation7 + $0x178] sm:$0xff]
    %v670 = vld [vmem:[#allocation7 + $0x180] sm:$0xff]
    %v671 = vld [vmem:[#allocation7 + $0x188] sm:$0xff]
    %v672 = vld [vmem:[#allocation7 + $0x190] sm:$0xff]
    %v673 = vld [vmem:[#allocation7 + $0x198] sm:$0xff]
    %v674 = vld [vmem:[#allocation7 + $0x1a0] sm:$0xff]
    %v675 = vld [vmem:[#allocation7 + $0x1a8] sm:$0xff]
    %v676 = vld [vmem:[#allocation7 + $0x1b0] sm:$0xff]
    %v677 = vld [vmem:[#allocation7 + $0x1b8] sm:$0xff]
    %v678 = vld [vmem:[#allocation7 + $0x1c0] sm:$0xff]
    %v679 = vld [vmem:[#allocation7 + $0x1c8] sm:$0xff]
    %v680 = vld [vmem:[#allocation7 + $0x1d0] sm:$0xff]
    %v681 = vld [vmem:[#allocation7 + $0x1d8] sm:$0xff]
    %v682 = vld [vmem:[#allocation7 + $0x1e0] sm:$0xff]
    %v683 = vld [vmem:[#allocation7 + $0x1e8] sm:$0xff]
    %v684 = vld [vmem:[#allocation7 + $0x1f0] sm:$0xff]
    %v685 = vld [vmem:[#allocation7 + $0x1f8] sm:$0xff]
    %v686 = vand.u32 %v623, 4294901760
    %687 = vmatprep.subr.mxu0 %v686
    %v688 = vand.u32 %v622, 4294901760
    %689 = vmatpush1.msra.mxu0 %v688
    %v690 = vand.u32 %v625, 4294901760
    %691 = vmatprep.subr.mxu0 %v690
    %v692 = vand.u32 %v624, 4294901760
    %693 = vmatpush1.msra.mxu0 %v692
    %v694 = vand.u32 %v627, 4294901760
    %695 = vmatprep.subr.mxu0 %v694
    %v696 = vand.u32 %v626, 4294901760
    %697 = vmatpush1.msra.mxu0 %v696
    %v698 = vand.u32 %v629, 4294901760
    %699 = vmatprep.subr.mxu0 %v698
    %v700 = vand.u32 %v628, 4294901760
    %701 = vmatpush1.msra.mxu0 %v700
    %v702 = vand.u32 %v631, 4294901760
    %703 = vmatprep.subr.mxu0 %v702
    %v704 = vand.u32 %v630, 4294901760
    %705 = vmatpush1.msra.mxu0 %v704
    %v706 = vand.u32 %v633, 4294901760
    %707 = vmatprep.subr.mxu0 %v706
    %v708 = vand.u32 %v632, 4294901760
    %709 = vmatpush1.msra.mxu0 %v708
    %v710 = vand.u32 %v635, 4294901760
    %711 = vmatprep.subr.mxu0 %v710
    %v712 = vand.u32 %v634, 4294901760
    %713 = vmatpush1.msra.mxu0 %v712
    %v714 = vand.u32 %v637, 4294901760
    %715 = vmatprep.subr.mxu0 %v714
    %v716 = vand.u32 %v636, 4294901760
    %717 = vmatpush1.msra.mxu0 %v716
    %v718 = vand.u32 %v639, 4294901760
    %719 = vmatprep.subr.mxu0 %v718
    %v720 = vand.u32 %v638, 4294901760
    %721 = vmatpush1.msra.mxu0 %v720
    %v722 = vand.u32 %v641, 4294901760
    %723 = vmatprep.subr.mxu0 %v722
    %v724 = vand.u32 %v640, 4294901760
    %725 = vmatpush1.msra.mxu0 %v724
    %v726 = vand.u32 %v643, 4294901760
    %727 = vmatprep.subr.mxu0 %v726
    %v728 = vand.u32 %v642, 4294901760
    %729 = vmatpush1.msra.mxu0 %v728
    %v730 = vand.u32 %v645, 4294901760
    %731 = vmatprep.subr.mxu0 %v730
    %v732 = vand.u32 %v644, 4294901760
    %733 = vmatpush1.msra.mxu0 %v732
    %v734 = vand.u32 %v647, 4294901760
    %735 = vmatprep.subr.mxu0 %v734
    %v736 = vand.u32 %v646, 4294901760
    %737 = vmatpush1.msra.mxu0 %v736
    %v738 = vand.u32 %v649, 4294901760
    %739 = vmatprep.subr.mxu0 %v738
    %v740 = vand.u32 %v648, 4294901760
    %741 = vmatpush1.msra.mxu0 %v740
    %v742 = vand.u32 %v651, 4294901760
    %743 = vmatprep.subr.mxu0 %v742
    %v744 = vand.u32 %v650, 4294901760
    %745 = vmatpush1.msra.mxu0 %v744
    %v746 = vand.u32 %v653, 4294901760
    %747 = vmatprep.subr.mxu0 %v746
    %v748 = vand.u32 %v652, 4294901760
    %749 = vmatpush1.msra.mxu0 %v748
    %v750 = vand.u32 %v655, 4294901760
    %751 = vmatprep.subr.mxu0 %v750
    %v752 = vand.u32 %v654, 4294901760
    %753 = vmatpush1.msra.mxu0 %v752
    %v754 = vand.u32 %v657, 4294901760
    %755 = vmatprep.subr.mxu0 %v754
    %v756 = vand.u32 %v656, 4294901760
    %757 = vmatpush1.msra.mxu0 %v756
    %v758 = vand.u32 %v659, 4294901760
    %759 = vmatprep.subr.mxu0 %v758
    %v760 = vand.u32 %v658, 4294901760
    %761 = vmatpush1.msra.mxu0 %v760
    %v762 = vand.u32 %v661, 4294901760
    %763 = vmatprep.subr.mxu0 %v762
    %v764 = vand.u32 %v660, 4294901760
    %765 = vmatpush1.msra.mxu0 %v764
    %v766 = vand.u32 %v663, 4294901760
    %767 = vmatprep.subr.mxu0 %v766
    %v768 = vand.u32 %v662, 4294901760
    %769 = vmatpush1.msra.mxu0 %v768
    %v770 = vand.u32 %v665, 4294901760
    %771 = vmatprep.subr.mxu0 %v770
    %v772 = vand.u32 %v664, 4294901760
    %773 = vmatpush1.msra.mxu0 %v772
    %v774 = vand.u32 %v667, 4294901760
    %775 = vmatprep.subr.mxu0 %v774
    %v776 = vand.u32 %v666, 4294901760
    %777 = vmatpush1.msra.mxu0 %v776
    %v778 = vand.u32 %v669, 4294901760
    %779 = vmatprep.subr.mxu0 %v778
    %v780 = vand.u32 %v668, 4294901760
    %781 = vmatpush1.msra.mxu0 %v780
    %v782 = vand.u32 %v671, 4294901760
    %783 = vmatprep.subr.mxu0 %v782
    %v784 = vand.u32 %v670, 4294901760
    %785 = vmatpush1.msra.mxu0 %v784
    %v786 = vand.u32 %v673, 4294901760
    %787 = vmatprep.subr.mxu0 %v786
    %v788 = vand.u32 %v672, 4294901760
    %789 = vmatpush1.msra.mxu0 %v788
    %v790 = vand.u32 %v675, 4294901760
    %791 = vmatprep.subr.mxu0 %v790
    %v792 = vand.u32 %v674, 4294901760
    %793 = vmatpush1.msra.mxu0 %v792
    %v794 = vand.u32 %v677, 4294901760
    %795 = vmatprep.subr.mxu0 %v794
    %v796 = vand.u32 %v676, 4294901760
    %797 = vmatpush1.msra.mxu0 %v796
    %v798 = vand.u32 %v679, 4294901760
    %799 = vmatprep.subr.mxu0 %v798
    %v800 = vand.u32 %v678, 4294901760
    %801 = vmatpush1.msra.mxu0 %v800
    %v802 = vand.u32 %v681, 4294901760
    %803 = vmatprep.subr.mxu0 %v802
    %v804 = vand.u32 %v680, 4294901760
    %805 = vmatpush1.msra.mxu0 %v804
    %v806 = vand.u32 %v683, 4294901760
    %807 = vmatprep.subr.mxu0 %v806
    %v808 = vand.u32 %v682, 4294901760
    %809 = vmatpush1.msra.mxu0 %v808
    %v810 = vand.u32 %v685, 4294901760
    %811 = vmatprep.subr.mxu0 %v810
    %v812 = vand.u32 %v684, 4294901760
    %813 = vmatpush1.msra.mxu0 %v812
    %v814 = vand.u32 %v621, 4294901760
    %v815 = vsub.f32 %v621, %v814
    %v816 = vand.u32 %v815, 4294901760
    %v817 = vsub.f32 %v815, %v816
    %v818 = vand.u32 %v817, 4294901760
    %819 = vmatprep.mubr.f32.mxu0 %v818
    %v820 = vand.u32 %v620, 4294901760
    %v821 = vsub.f32 %v620, %v820
    %v822 = vand.u32 %v821, 4294901760
    %v823 = vsub.f32 %v821, %v822
    %v824 = vand.u32 %v823, 4294901760
    %825 = vmatmul.mubr.f32.gmra.mrb[0].mxu0 %v824
    %v826 = vpop.f32.mrb[0].mxu0
    %v827 = vadd.f32 0.0, %v826
    %v828 = vpop.f32.mrb[0].mxu0
    %v829 = vadd.f32 0.0, %v828
    %830 = vdwg.mxu0
    %v831 = vand.u32 %v623, 4294901760
    %v832 = vsub.f32 %v623, %v831
    %v833 = vand.u32 %v832, 4294901760
    %v834 = vsub.f32 %v832, %v833
    %v835 = vand.u32 %v834, 4294901760
    %836 = vmatprep.subr.mxu0 %v835
    %v837 = vand.u32 %v622, 4294901760
    %v838 = vsub.f32 %v622, %v837
    %v839 = vand.u32 %v838, 4294901760
    %v840 = vsub.f32 %v838, %v839
    %v841 = vand.u32 %v840, 4294901760
    %842 = vmatpush1.msra.mxu0 %v841
    %v843 = vand.u32 %v625, 4294901760
    %v844 = vsub.f32 %v625, %v843
    %v845 = vand.u32 %v844, 4294901760
    %v846 = vsub.f32 %v844, %v845
    %v847 = vand.u32 %v846, 4294901760
    %848 = vmatprep.subr.mxu0 %v847
    %v849 = vand.u32 %v624, 4294901760
    %v850 = vsub.f32 %v624, %v849
    %v851 = vand.u32 %v850, 4294901760
    %v852 = vsub.f32 %v850, %v851
    %v853 = vand.u32 %v852, 4294901760
    %854 = vmatpush1.msra.mxu0 %v853
    %v855 = vand.u32 %v627, 4294901760
    %v856 = vsub.f32 %v627, %v855
    %v857 = vand.u32 %v856, 4294901760
    %v858 = vsub.f32 %v856, %v857
    %v859 = vand.u32 %v858, 4294901760
    %860 = vmatprep.subr.mxu0 %v859
    %v861 = vand.u32 %v626, 4294901760
    %v862 = vsub.f32 %v626, %v861
    %v863 = vand.u32 %v862, 4294901760
    %v864 = vsub.f32 %v862, %v863
    %v865 = vand.u32 %v864, 4294901760
    %866 = vmatpush1.msra.mxu0 %v865
    %v867 = vand.u32 %v629, 4294901760
    %v868 = vsub.f32 %v629, %v867
    %v869 = vand.u32 %v868, 4294901760
    %v870 = vsub.f32 %v868, %v869
    %v871 = vand.u32 %v870, 4294901760
    %872 = vmatprep.subr.mxu0 %v871
    %v873 = vand.u32 %v628, 4294901760
    %v874 = vsub.f32 %v628, %v873
    %v875 = vand.u32 %v874, 4294901760
    %v876 = vsub.f32 %v874, %v875
    %v877 = vand.u32 %v876, 4294901760
    %878 = vmatpush1.msra.mxu0 %v877
    %v879 = vand.u32 %v631, 4294901760
    %v880 = vsub.f32 %v631, %v879
    %v881 = vand.u32 %v880, 4294901760
    %v882 = vsub.f32 %v880, %v881
    %v883 = vand.u32 %v882, 4294901760
    %884 = vmatprep.subr.mxu0 %v883
    %v885 = vand.u32 %v630, 4294901760
    %v886 = vsub.f32 %v630, %v885
    %v887 = vand.u32 %v886, 4294901760
    %v888 = vsub.f32 %v886, %v887
    %v889 = vand.u32 %v888, 4294901760
    %890 = vmatpush1.msra.mxu0 %v889
    %v891 = vand.u32 %v633, 4294901760
    %v892 = vsub.f32 %v633, %v891
    %v893 = vand.u32 %v892, 4294901760
    %v894 = vsub.f32 %v892, %v893
    %v895 = vand.u32 %v894, 4294901760
    %896 = vmatprep.subr.mxu0 %v895
    %v897 = vand.u32 %v632, 4294901760
    %v898 = vsub.f32 %v632, %v897
    %v899 = vand.u32 %v898, 4294901760
    %v900 = vsub.f32 %v898, %v899
    %v901 = vand.u32 %v900, 4294901760
    %902 = vmatpush1.msra.mxu0 %v901
    %v903 = vand.u32 %v635, 4294901760
    %v904 = vsub.f32 %v635, %v903
    %v905 = vand.u32 %v904, 4294901760
    %v906 = vsub.f32 %v904, %v905
    %v907 = vand.u32 %v906, 4294901760
    %908 = vmatprep.subr.mxu0 %v907
    %v909 = vand.u32 %v634, 4294901760
    %v910 = vsub.f32 %v634, %v909
    %v911 = vand.u32 %v910, 4294901760
    %v912 = vsub.f32 %v910, %v911
    %v913 = vand.u32 %v912, 4294901760
    %914 = vmatpush1.msra.mxu0 %v913
    %v915 = vand.u32 %v637, 4294901760
    %v916 = vsub.f32 %v637, %v915
    %v917 = vand.u32 %v916, 4294901760
    %v918 = vsub.f32 %v916, %v917
    %v919 = vand.u32 %v918, 4294901760
    %920 = vmatprep.subr.mxu0 %v919
    %v921 = vand.u32 %v636, 4294901760
    %v922 = vsub.f32 %v636, %v921
    %v923 = vand.u32 %v922, 4294901760
    %v924 = vsub.f32 %v922, %v923
    %v925 = vand.u32 %v924, 4294901760
    %926 = vmatpush1.msra.mxu0 %v925
    %v927 = vand.u32 %v639, 4294901760
    %v928 = vsub.f32 %v639, %v927
    %v929 = vand.u32 %v928, 4294901760
    %v930 = vsub.f32 %v928, %v929
    %v931 = vand.u32 %v930, 4294901760
    %932 = vmatprep.subr.mxu0 %v931
    %v933 = vand.u32 %v638, 4294901760
    %v934 = vsub.f32 %v638, %v933
    %v935 = vand.u32 %v934, 4294901760
    %v936 = vsub.f32 %v934, %v935
    %v937 = vand.u32 %v936, 4294901760
    %938 = vmatpush1.msra.mxu0 %v937
    %v939 = vand.u32 %v641, 4294901760
    %v940 = vsub.f32 %v641, %v939
    %v941 = vand.u32 %v940, 4294901760
    %v942 = vsub.f32 %v940, %v941
    %v943 = vand.u32 %v942, 4294901760
    %944 = vmatprep.subr.mxu0 %v943
    %v945 = vand.u32 %v640, 4294901760
    %v946 = vsub.f32 %v640, %v945
    %v947 = vand.u32 %v946, 4294901760
    %v948 = vsub.f32 %v946, %v947
    %v949 = vand.u32 %v948, 4294901760
    %950 = vmatpush1.msra.mxu0 %v949
    %v951 = vand.u32 %v643, 4294901760
    %v952 = vsub.f32 %v643, %v951
    %v953 = vand.u32 %v952, 4294901760
    %v954 = vsub.f32 %v952, %v953
    %v955 = vand.u32 %v954, 4294901760
    %956 = vmatprep.subr.mxu0 %v955
    %v957 = vand.u32 %v642, 4294901760
    %v958 = vsub.f32 %v642, %v957
    %v959 = vand.u32 %v958, 4294901760
    %v960 = vsub.f32 %v958, %v959
    %v961 = vand.u32 %v960, 4294901760
    %962 = vmatpush1.msra.mxu0 %v961
    %v963 = vand.u32 %v645, 4294901760
    %v964 = vsub.f32 %v645, %v963
    %v965 = vand.u32 %v964, 4294901760
    %v966 = vsub.f32 %v964, %v965
    %v967 = vand.u32 %v966, 4294901760
    %968 = vmatprep.subr.mxu0 %v967
    %v969 = vand.u32 %v644, 4294901760
    %v970 = vsub.f32 %v644, %v969
    %v971 = vand.u32 %v970, 4294901760
    %v972 = vsub.f32 %v970, %v971
    %v973 = vand.u32 %v972, 4294901760
    %974 = vmatpush1.msra.mxu0 %v973
    %v975 = vand.u32 %v647, 4294901760
    %v976 = vsub.f32 %v647, %v975
    %v977 = vand.u32 %v976, 4294901760
    %v978 = vsub.f32 %v976, %v977
    %v979 = vand.u32 %v978, 4294901760
    %980 = vmatprep.subr.mxu0 %v979
    %v981 = vand.u32 %v646, 4294901760
    %v982 = vsub.f32 %v646, %v981
    %v983 = vand.u32 %v982, 4294901760
    %v984 = vsub.f32 %v982, %v983
    %v985 = vand.u32 %v984, 4294901760
    %986 = vmatpush1.msra.mxu0 %v985
    %v987 = vand.u32 %v649, 4294901760
    %v988 = vsub.f32 %v649, %v987
    %v989 = vand.u32 %v988, 4294901760
    %v990 = vsub.f32 %v988, %v989
    %v991 = vand.u32 %v990, 4294901760
    %992 = vmatprep.subr.mxu0 %v991
    %v993 = vand.u32 %v648, 4294901760
    %v994 = vsub.f32 %v648, %v993
    %v995 = vand.u32 %v994, 4294901760
    %v996 = vsub.f32 %v994, %v995
    %v997 = vand.u32 %v996, 4294901760
    %998 = vmatpush1.msra.mxu0 %v997
    %v999 = vand.u32 %v651, 4294901760
    %v1000 = vsub.f32 %v651, %v999
    %v1001 = vand.u32 %v1000, 4294901760
    %v1002 = vsub.f32 %v1000, %v1001
    %v1003 = vand.u32 %v1002, 4294901760
    %1004 = vmatprep.subr.mxu0 %v1003
    %v1005 = vand.u32 %v650, 4294901760
    %v1006 = vsub.f32 %v650, %v1005
    %v1007 = vand.u32 %v1006, 4294901760
    %v1008 = vsub.f32 %v1006, %v1007
    %v1009 = vand.u32 %v1008, 4294901760
    %1010 = vmatpush1.msra.mxu0 %v1009
    %v1011 = vand.u32 %v653, 4294901760
    %v1012 = vsub.f32 %v653, %v1011
    %v1013 = vand.u32 %v1012, 4294901760
    %v1014 = vsub.f32 %v1012, %v1013
    %v1015 = vand.u32 %v1014, 4294901760
    %1016 = vmatprep.subr.mxu0 %v1015
    %v1017 = vand.u32 %v652, 4294901760
    %v1018 = vsub.f32 %v652, %v1017
    %v1019 = vand.u32 %v1018, 4294901760
    %v1020 = vsub.f32 %v1018, %v1019
    %v1021 = vand.u32 %v1020, 4294901760
    %1022 = vmatpush1.msra.mxu0 %v1021
    %v1023 = vand.u32 %v655, 4294901760
    %v1024 = vsub.f32 %v655, %v1023
    %v1025 = vand.u32 %v1024, 4294901760
    %v1026 = vsub.f32 %v1024, %v1025
    %v1027 = vand.u32 %v1026, 4294901760
    %1028 = vmatprep.subr.mxu0 %v1027
    %v1029 = vand.u32 %v654, 4294901760
    %v1030 = vsub.f32 %v654, %v1029
    %v1031 = vand.u32 %v1030, 4294901760
    %v1032 = vsub.f32 %v1030, %v1031
    %v1033 = vand.u32 %v1032, 4294901760
    %1034 = vmatpush1.msra.mxu0 %v1033
    %v1035 = vand.u32 %v657, 4294901760
    %v1036 = vsub.f32 %v657, %v1035
    %v1037 = vand.u32 %v1036, 4294901760
    %v1038 = vsub.f32 %v1036, %v1037
    %v1039 = vand.u32 %v1038, 4294901760
    %1040 = vmatprep.subr.mxu0 %v1039
    %v1041 = vand.u32 %v656, 4294901760
    %v1042 = vsub.f32 %v656, %v1041
    %v1043 = vand.u32 %v1042, 4294901760
    %v1044 = vsub.f32 %v1042, %v1043
    %v1045 = vand.u32 %v1044, 4294901760
    %1046 = vmatpush1.msra.mxu0 %v1045
    %v1047 = vand.u32 %v659, 4294901760
    %v1048 = vsub.f32 %v659, %v1047
    %v1049 = vand.u32 %v1048, 4294901760
    %v1050 = vsub.f32 %v1048, %v1049
    %v1051 = vand.u32 %v1050, 4294901760
    %1052 = vmatprep.subr.mxu0 %v1051
    %v1053 = vand.u32 %v658, 4294901760
    %v1054 = vsub.f32 %v658, %v1053
    %v1055 = vand.u32 %v1054, 4294901760
    %v1056 = vsub.f32 %v1054, %v1055
    %v1057 = vand.u32 %v1056, 4294901760
    %1058 = vmatpush1.msra.mxu0 %v1057
    %v1059 = vand.u32 %v661, 4294901760
    %v1060 = vsub.f32 %v661, %v1059
    %v1061 = vand.u32 %v1060, 4294901760
    %v1062 = vsub.f32 %v1060, %v1061
    %v1063 = vand.u32 %v1062, 4294901760
    %1064 = vmatprep.subr.mxu0 %v1063
    %v1065 = vand.u32 %v660, 4294901760
    %v1066 = vsub.f32 %v660, %v1065
    %v1067 = vand.u32 %v1066, 4294901760
    %v1068 = vsub.f32 %v1066, %v1067
    %v1069 = vand.u32 %v1068, 4294901760
    %1070 = vmatpush1.msra.mxu0 %v1069
    %v1071 = vand.u32 %v663, 4294901760
    %v1072 = vsub.f32 %v663, %v1071
    %v1073 = vand.u32 %v1072, 4294901760
    %v1074 = vsub.f32 %v1072, %v1073
    %v1075 = vand.u32 %v1074, 4294901760
    %1076 = vmatprep.subr.mxu0 %v1075
    %v1077 = vand.u32 %v662, 4294901760
    %v1078 = vsub.f32 %v662, %v1077
    %v1079 = vand.u32 %v1078, 4294901760
    %v1080 = vsub.f32 %v1078, %v1079
    %v1081 = vand.u32 %v1080, 4294901760
    %1082 = vmatpush1.msra.mxu0 %v1081
    %v1083 = vand.u32 %v665, 4294901760
    %v1084 = vsub.f32 %v665, %v1083
    %v1085 = vand.u32 %v1084, 4294901760
    %v1086 = vsub.f32 %v1084, %v1085
    %v1087 = vand.u32 %v1086, 4294901760
    %1088 = vmatprep.subr.mxu0 %v1087
    %v1089 = vand.u32 %v664, 4294901760
    %v1090 = vsub.f32 %v664, %v1089
    %v1091 = vand.u32 %v1090, 4294901760
    %v1092 = vsub.f32 %v1090, %v1091
    %v1093 = vand.u32 %v1092, 4294901760
    %1094 = vmatpush1.msra.mxu0 %v1093
    %v1095 = vand.u32 %v667, 4294901760
    %v1096 = vsub.f32 %v667, %v1095
    %v1097 = vand.u32 %v1096, 4294901760
    %v1098 = vsub.f32 %v1096, %v1097
    %v1099 = vand.u32 %v1098, 4294901760
    %1100 = vmatprep.subr.mxu0 %v1099
    %v1101 = vand.u32 %v666, 4294901760
    %v1102 = vsub.f32 %v666, %v1101
    %v1103 = vand.u32 %v1102, 4294901760
    %v1104 = vsub.f32 %v1102, %v1103
    %v1105 = vand.u32 %v1104, 4294901760
    %1106 = vmatpush1.msra.mxu0 %v1105
    %v1107 = vand.u32 %v669, 4294901760
    %v1108 = vsub.f32 %v669, %v1107
    %v1109 = vand.u32 %v1108, 4294901760
    %v1110 = vsub.f32 %v1108, %v1109
    %v1111 = vand.u32 %v1110, 4294901760
    %1112 = vmatprep.subr.mxu0 %v1111
    %v1113 = vand.u32 %v668, 4294901760
    %v1114 = vsub.f32 %v668, %v1113
    %v1115 = vand.u32 %v1114, 4294901760
    %v1116 = vsub.f32 %v1114, %v1115
    %v1117 = vand.u32 %v1116, 4294901760
    %1118 = vmatpush1.msra.mxu0 %v1117
    %v1119 = vand.u32 %v671, 4294901760
    %v1120 = vsub.f32 %v671, %v1119
    %v1121 = vand.u32 %v1120, 4294901760
    %v1122 = vsub.f32 %v1120, %v1121
    %v1123 = vand.u32 %v1122, 4294901760
    %1124 = vmatprep.subr.mxu0 %v1123
    %v1125 = vand.u32 %v670, 4294901760
    %v1126 = vsub.f32 %v670, %v1125
    %v1127 = vand.u32 %v1126, 4294901760
    %v1128 = vsub.f32 %v1126, %v1127
    %v1129 = vand.u32 %v1128, 4294901760
    %1130 = vmatpush1.msra.mxu0 %v1129
    %v1131 = vand.u32 %v673, 4294901760
    %v1132 = vsub.f32 %v673, %v1131
    %v1133 = vand.u32 %v1132, 4294901760
    %v1134 = vsub.f32 %v1132, %v1133
    %v1135 = vand.u32 %v1134, 4294901760
    %1136 = vmatprep.subr.mxu0 %v1135
    %v1137 = vand.u32 %v672, 4294901760
    %v1138 = vsub.f32 %v672, %v1137
    %v1139 = vand.u32 %v1138, 4294901760
    %v1140 = vsub.f32 %v1138, %v1139
    %v1141 = vand.u32 %v1140, 4294901760
    %1142 = vmatpush1.msra.mxu0 %v1141
    %v1143 = vand.u32 %v675, 4294901760
    %v1144 = vsub.f32 %v675, %v1143
    %v1145 = vand.u32 %v1144, 4294901760
    %v1146 = vsub.f32 %v1144, %v1145
    %v1147 = vand.u32 %v1146, 4294901760
    %1148 = vmatprep.subr.mxu0 %v1147
    %v1149 = vand.u32 %v674, 4294901760
    %v1150 = vsub.f32 %v674, %v1149
    %v1151 = vand.u32 %v1150, 4294901760
    %v1152 = vsub.f32 %v1150, %v1151
    %v1153 = vand.u32 %v1152, 4294901760
    %1154 = vmatpush1.msra.mxu0 %v1153
    %v1155 = vand.u32 %v677, 4294901760
    %v1156 = vsub.f32 %v677, %v1155
    %v1157 = vand.u32 %v1156, 4294901760
    %v1158 = vsub.f32 %v1156, %v1157
    %v1159 = vand.u32 %v1158, 4294901760
    %1160 = vmatprep.subr.mxu0 %v1159
    %v1161 = vand.u32 %v676, 4294901760
    %v1162 = vsub.f32 %v676, %v1161
    %v1163 = vand.u32 %v1162, 4294901760
    %v1164 = vsub.f32 %v1162, %v1163
    %v1165 = vand.u32 %v1164, 4294901760
    %1166 = vmatpush1.msra.mxu0 %v1165
    %v1167 = vand.u32 %v679, 4294901760
    %v1168 = vsub.f32 %v679, %v1167
    %v1169 = vand.u32 %v1168, 4294901760
    %v1170 = vsub.f32 %v1168, %v1169
    %v1171 = vand.u32 %v1170, 4294901760
    %1172 = vmatprep.subr.mxu0 %v1171
    %v1173 = vand.u32 %v678, 4294901760
    %v1174 = vsub.f32 %v678, %v1173
    %v1175 = vand.u32 %v1174, 4294901760
    %v1176 = vsub.f32 %v1174, %v1175
    %v1177 = vand.u32 %v1176, 4294901760
    %1178 = vmatpush1.msra.mxu0 %v1177
    %v1179 = vand.u32 %v681, 4294901760
    %v1180 = vsub.f32 %v681, %v1179
    %v1181 = vand.u32 %v1180, 4294901760
    %v1182 = vsub.f32 %v1180, %v1181
    %v1183 = vand.u32 %v1182, 4294901760
    %1184 = vmatprep.subr.mxu0 %v1183
    %v1185 = vand.u32 %v680, 4294901760
    %v1186 = vsub.f32 %v680, %v1185
    %v1187 = vand.u32 %v1186, 4294901760
    %v1188 = vsub.f32 %v1186, %v1187
    %v1189 = vand.u32 %v1188, 4294901760
    %1190 = vmatpush1.msra.mxu0 %v1189
    %v1191 = vand.u32 %v683, 4294901760
    %v1192 = vsub.f32 %v683, %v1191
    %v1193 = vand.u32 %v1192, 4294901760
    %v1194 = vsub.f32 %v1192, %v1193
    %v1195 = vand.u32 %v1194, 4294901760
    %1196 = vmatprep.subr.mxu0 %v1195
    %v1197 = vand.u32 %v682, 4294901760
    %v1198 = vsub.f32 %v682, %v1197
    %v1199 = vand.u32 %v1198, 4294901760
    %v1200 = vsub.f32 %v1198, %v1199
    %v1201 = vand.u32 %v1200, 4294901760
    %1202 = vmatpush1.msra.mxu0 %v1201
    %v1203 = vand.u32 %v685, 4294901760
    %v1204 = vsub.f32 %v685, %v1203
    %v1205 = vand.u32 %v1204, 4294901760
    %v1206 = vsub.f32 %v1204, %v1205
    %v1207 = vand.u32 %v1206, 4294901760
    %1208 = vmatprep.subr.mxu0 %v1207
    %v1209 = vand.u32 %v684, 4294901760
    %v1210 = vsub.f32 %v684, %v1209
    %v1211 = vand.u32 %v1210, 4294901760
    %v1212 = vsub.f32 %v1210, %v1211
    %v1213 = vand.u32 %v1212, 4294901760
    %1214 = vmatpush1.msra.mxu0 %v1213
    %v1215 = vand.u32 %v621, 4294901760
    %1216 = vmatprep.mubr.f32.mxu0 %v1215
    %v1217 = vand.u32 %v620, 4294901760
    %1218 = vmatmul.mubr.f32.gmra.mrb[0].mxu0 %v1217
    %v1219 = vpop.f32.mrb[0].mxu0
    %v1220 = vadd.f32 %v827, %v1219
    %v1221 = vpop.f32.mrb[0].mxu0
    %v1222 = vadd.f32 %v829, %v1221
    %1223 = vdwg.mxu0
    %v1224 = vand.u32 %v623, 4294901760
    %v1225 = vsub.f32 %v623, %v1224
    %1226 = vmatprep.subr.mxu0 %v1225
    %v1227 = vand.u32 %v622, 4294901760
    %v1228 = vsub.f32 %v622, %v1227
    %1229 = vmatpush1.msra.mxu0 %v1228
    %v1230 = vand.u32 %v625, 4294901760
    %v1231 = vsub.f32 %v625, %v1230
    %1232 = vmatprep.subr.mxu0 %v1231
    %v1233 = vand.u32 %v624, 4294901760
    %v1234 = vsub.f32 %v624, %v1233
    %1235 = vmatpush1.msra.mxu0 %v1234
    %v1236 = vand.u32 %v627, 4294901760
    %v1237 = vsub.f32 %v627, %v1236
    %1238 = vmatprep.subr.mxu0 %v1237
    %v1239 = vand.u32 %v626, 4294901760
    %v1240 = vsub.f32 %v626, %v1239
    %1241 = vmatpush1.msra.mxu0 %v1240
    %v1242 = vand.u32 %v629, 4294901760
    %v1243 = vsub.f32 %v629, %v1242
    %1244 = vmatprep.subr.mxu0 %v1243
    %v1245 = vand.u32 %v628, 4294901760
    %v1246 = vsub.f32 %v628, %v1245
    %1247 = vmatpush1.msra.mxu0 %v1246
    %v1248 = vand.u32 %v631, 4294901760
    %v1249 = vsub.f32 %v631, %v1248
    %1250 = vmatprep.subr.mxu0 %v1249
    %v1251 = vand.u32 %v630, 4294901760
    %v1252 = vsub.f32 %v630, %v1251
    %1253 = vmatpush1.msra.mxu0 %v1252
    %v1254 = vand.u32 %v633, 4294901760
    %v1255 = vsub.f32 %v633, %v1254
    %1256 = vmatprep.subr.mxu0 %v1255
    %v1257 = vand.u32 %v632, 4294901760
    %v1258 = vsub.f32 %v632, %v1257
    %1259 = vmatpush1.msra.mxu0 %v1258
    %v1260 = vand.u32 %v635, 4294901760
    %v1261 = vsub.f32 %v635, %v1260
    %1262 = vmatprep.subr.mxu0 %v1261
    %v1263 = vand.u32 %v634, 4294901760
    %v1264 = vsub.f32 %v634, %v1263
    %1265 = vmatpush1.msra.mxu0 %v1264
    %v1266 = vand.u32 %v637, 4294901760
    %v1267 = vsub.f32 %v637, %v1266
    %1268 = vmatprep.subr.mxu0 %v1267
    %v1269 = vand.u32 %v636, 4294901760
    %v1270 = vsub.f32 %v636, %v1269
    %1271 = vmatpush1.msra.mxu0 %v1270
    %v1272 = vand.u32 %v639, 4294901760
    %v1273 = vsub.f32 %v639, %v1272
    %1274 = vmatprep.subr.mxu0 %v1273
    %v1275 = vand.u32 %v638, 4294901760
    %v1276 = vsub.f32 %v638, %v1275
    %1277 = vmatpush1.msra.mxu0 %v1276
    %v1278 = vand.u32 %v641, 4294901760
    %v1279 = vsub.f32 %v641, %v1278
    %1280 = vmatprep.subr.mxu0 %v1279
    %v1281 = vand.u32 %v640, 4294901760
    %v1282 = vsub.f32 %v640, %v1281
    %1283 = vmatpush1.msra.mxu0 %v1282
    %v1284 = vand.u32 %v643, 4294901760
    %v1285 = vsub.f32 %v643, %v1284
    %1286 = vmatprep.subr.mxu0 %v1285
    %v1287 = vand.u32 %v642, 4294901760
    %v1288 = vsub.f32 %v642, %v1287
    %1289 = vmatpush1.msra.mxu0 %v1288
    %v1290 = vand.u32 %v645, 4294901760
    %v1291 = vsub.f32 %v645, %v1290
    %1292 = vmatprep.subr.mxu0 %v1291
    %v1293 = vand.u32 %v644, 4294901760
    %v1294 = vsub.f32 %v644, %v1293
    %1295 = vmatpush1.msra.mxu0 %v1294
    %v1296 = vand.u32 %v647, 4294901760
    %v1297 = vsub.f32 %v647, %v1296
    %1298 = vmatprep.subr.mxu0 %v1297
    %v1299 = vand.u32 %v646, 4294901760
    %v1300 = vsub.f32 %v646, %v1299
    %1301 = vmatpush1.msra.mxu0 %v1300
    %v1302 = vand.u32 %v649, 4294901760
    %v1303 = vsub.f32 %v649, %v1302
    %1304 = vmatprep.subr.mxu0 %v1303
    %v1305 = vand.u32 %v648, 4294901760
    %v1306 = vsub.f32 %v648, %v1305
    %1307 = vmatpush1.msra.mxu0 %v1306
    %v1308 = vand.u32 %v651, 4294901760
    %v1309 = vsub.f32 %v651, %v1308
    %1310 = vmatprep.subr.mxu0 %v1309
    %v1311 = vand.u32 %v650, 4294901760
    %v1312 = vsub.f32 %v650, %v1311
    %1313 = vmatpush1.msra.mxu0 %v1312
    %v1314 = vand.u32 %v653, 4294901760
    %v1315 = vsub.f32 %v653, %v1314
    %1316 = vmatprep.subr.mxu0 %v1315
    %v1317 = vand.u32 %v652, 4294901760
    %v1318 = vsub.f32 %v652, %v1317
    %1319 = vmatpush1.msra.mxu0 %v1318
    %v1320 = vand.u32 %v655, 4294901760
    %v1321 = vsub.f32 %v655, %v1320
    %1322 = vmatprep.subr.mxu0 %v1321
    %v1323 = vand.u32 %v654, 4294901760
    %v1324 = vsub.f32 %v654, %v1323
    %1325 = vmatpush1.msra.mxu0 %v1324
    %v1326 = vand.u32 %v657, 4294901760
    %v1327 = vsub.f32 %v657, %v1326
    %1328 = vmatprep.subr.mxu0 %v1327
    %v1329 = vand.u32 %v656, 4294901760
    %v1330 = vsub.f32 %v656, %v1329
    %1331 = vmatpush1.msra.mxu0 %v1330
    %v1332 = vand.u32 %v659, 4294901760
    %v1333 = vsub.f32 %v659, %v1332
    %1334 = vmatprep.subr.mxu0 %v1333
    %v1335 = vand.u32 %v658, 4294901760
    %v1336 = vsub.f32 %v658, %v1335
    %1337 = vmatpush1.msra.mxu0 %v1336
    %v1338 = vand.u32 %v661, 4294901760
    %v1339 = vsub.f32 %v661, %v1338
    %1340 = vmatprep.subr.mxu0 %v1339
    %v1341 = vand.u32 %v660, 4294901760
    %v1342 = vsub.f32 %v660, %v1341
    %1343 = vmatpush1.msra.mxu0 %v1342
    %v1344 = vand.u32 %v663, 4294901760
    %v1345 = vsub.f32 %v663, %v1344
    %1346 = vmatprep.subr.mxu0 %v1345
    %v1347 = vand.u32 %v662, 4294901760
    %v1348 = vsub.f32 %v662, %v1347
    %1349 = vmatpush1.msra.mxu0 %v1348
    %v1350 = vand.u32 %v665, 4294901760
    %v1351 = vsub.f32 %v665, %v1350
    %1352 = vmatprep.subr.mxu0 %v1351
    %v1353 = vand.u32 %v664, 4294901760
    %v1354 = vsub.f32 %v664, %v1353
    %1355 = vmatpush1.msra.mxu0 %v1354
    %v1356 = vand.u32 %v667, 4294901760
    %v1357 = vsub.f32 %v667, %v1356
    %1358 = vmatprep.subr.mxu0 %v1357
    %v1359 = vand.u32 %v666, 4294901760
    %v1360 = vsub.f32 %v666, %v1359
    %1361 = vmatpush1.msra.mxu0 %v1360
    %v1362 = vand.u32 %v669, 4294901760
    %v1363 = vsub.f32 %v669, %v1362
    %1364 = vmatprep.subr.mxu0 %v1363
    %v1365 = vand.u32 %v668, 4294901760
    %v1366 = vsub.f32 %v668, %v1365
    %1367 = vmatpush1.msra.mxu0 %v1366
    %v1368 = vand.u32 %v671, 4294901760
    %v1369 = vsub.f32 %v671, %v1368
    %1370 = vmatprep.subr.mxu0 %v1369
    %v1371 = vand.u32 %v670, 4294901760
    %v1372 = vsub.f32 %v670, %v1371
    %1373 = vmatpush1.msra.mxu0 %v1372
    %v1374 = vand.u32 %v673, 4294901760
    %v1375 = vsub.f32 %v673, %v1374
    %1376 = vmatprep.subr.mxu0 %v1375
    %v1377 = vand.u32 %v672, 4294901760
    %v1378 = vsub.f32 %v672, %v1377
    %1379 = vmatpush1.msra.mxu0 %v1378
    %v1380 = vand.u32 %v675, 4294901760
    %v1381 = vsub.f32 %v675, %v1380
    %1382 = vmatprep.subr.mxu0 %v1381
    %v1383 = vand.u32 %v674, 4294901760
    %v1384 = vsub.f32 %v674, %v1383
    %1385 = vmatpush1.msra.mxu0 %v1384
    %v1386 = vand.u32 %v677, 4294901760
    %v1387 = vsub.f32 %v677, %v1386
    %1388 = vmatprep.subr.mxu0 %v1387
    %v1389 = vand.u32 %v676, 4294901760
    %v1390 = vsub.f32 %v676, %v1389
    %1391 = vmatpush1.msra.mxu0 %v1390
    %v1392 = vand.u32 %v679, 4294901760
    %v1393 = vsub.f32 %v679, %v1392
    %1394 = vmatprep.subr.mxu0 %v1393
    %v1395 = vand.u32 %v678, 4294901760
    %v1396 = vsub.f32 %v678, %v1395
    %1397 = vmatpush1.msra.mxu0 %v1396
    %v1398 = vand.u32 %v681, 4294901760
    %v1399 = vsub.f32 %v681, %v1398
    %1400 = vmatprep.subr.mxu0 %v1399
    %v1401 = vand.u32 %v680, 4294901760
    %v1402 = vsub.f32 %v680, %v1401
    %1403 = vmatpush1.msra.mxu0 %v1402
    %v1404 = vand.u32 %v683, 4294901760
    %v1405 = vsub.f32 %v683, %v1404
    %1406 = vmatprep.subr.mxu0 %v1405
    %v1407 = vand.u32 %v682, 4294901760
    %v1408 = vsub.f32 %v682, %v1407
    %1409 = vmatpush1.msra.mxu0 %v1408
    %v1410 = vand.u32 %v685, 4294901760
    %v1411 = vsub.f32 %v685, %v1410
    %1412 = vmatprep.subr.mxu0 %v1411
    %v1413 = vand.u32 %v684, 4294901760
    %v1414 = vsub.f32 %v684, %v1413
    %1415 = vmatpush1.msra.mxu0 %v1414
    %v1416 = vand.u32 %v621, 4294901760
    %v1417 = vsub.f32 %v621, %v1416
    %1418 = vmatprep.mubr.f32.mxu0 %v1417
    %v1419 = vand.u32 %v620, 4294901760
    %v1420 = vsub.f32 %v620, %v1419
    %1421 = vmatmul.mubr.f32.gmra.mrb[0].mxu0 %v1420
    %v1422 = vpop.f32.mrb[0].mxu0
    %v1423 = vadd.f32 %v1220, %v1422
    %v1424 = vpop.f32.mrb[0].mxu0
    %v1425 = vadd.f32 %v1222, %v1424
    %1426 = vdwg.mxu0
    %v1427 = vand.u32 %v623, 4294901760
    %1428 = vmatprep.subr.mxu0 %v1427
    %v1429 = vand.u32 %v622, 4294901760
    %1430 = vmatpush1.msra.mxu0 %v1429
    %v1431 = vand.u32 %v625, 4294901760
    %1432 = vmatprep.subr.mxu0 %v1431
    %v1433 = vand.u32 %v624, 4294901760
    %1434 = vmatpush1.msra.mxu0 %v1433
    %v1435 = vand.u32 %v627, 4294901760
    %1436 = vmatprep.subr.mxu0 %v1435
    %v1437 = vand.u32 %v626, 4294901760
    %1438 = vmatpush1.msra.mxu0 %v1437
    %v1439 = vand.u32 %v629, 4294901760
    %1440 = vmatprep.subr.mxu0 %v1439
    %v1441 = vand.u32 %v628, 4294901760
    %1442 = vmatpush1.msra.mxu0 %v1441
    %v1443 = vand.u32 %v631, 4294901760
    %1444 = vmatprep.subr.mxu0 %v1443
    %v1445 = vand.u32 %v630, 4294901760
    %1446 = vmatpush1.msra.mxu0 %v1445
    %v1447 = vand.u32 %v633, 4294901760
    %1448 = vmatprep.subr.mxu0 %v1447
    %v1449 = vand.u32 %v632, 4294901760
    %1450 = vmatpush1.msra.mxu0 %v1449
    %v1451 = vand.u32 %v635, 4294901760
    %1452 = vmatprep.subr.mxu0 %v1451
    %v1453 = vand.u32 %v634, 4294901760
    %1454 = vmatpush1.msra.mxu0 %v1453
    %v1455 = vand.u32 %v637, 4294901760
    %1456 = vmatprep.subr.mxu0 %v1455
    %v1457 = vand.u32 %v636, 4294901760
    %1458 = vmatpush1.msra.mxu0 %v1457
    %v1459 = vand.u32 %v639, 4294901760
    %1460 = vmatprep.subr.mxu0 %v1459
    %v1461 = vand.u32 %v638, 4294901760
    %1462 = vmatpush1.msra.mxu0 %v1461
    %v1463 = vand.u32 %v641, 4294901760
    %1464 = vmatprep.subr.mxu0 %v1463
    %v1465 = vand.u32 %v640, 4294901760
    %1466 = vmatpush1.msra.mxu0 %v1465
    %v1467 = vand.u32 %v643, 4294901760
    %1468 = vmatprep.subr.mxu0 %v1467
    %v1469 = vand.u32 %v642, 4294901760
    %1470 = vmatpush1.msra.mxu0 %v1469
    %v1471 = vand.u32 %v645, 4294901760
    %1472 = vmatprep.subr.mxu0 %v1471
    %v1473 = vand.u32 %v644, 4294901760
    %1474 = vmatpush1.msra.mxu0 %v1473
    %v1475 = vand.u32 %v647, 4294901760
    %1476 = vmatprep.subr.mxu0 %v1475
    %v1477 = vand.u32 %v646, 4294901760
    %1478 = vmatpush1.msra.mxu0 %v1477
    %v1479 = vand.u32 %v649, 4294901760
    %1480 = vmatprep.subr.mxu0 %v1479
    %v1481 = vand.u32 %v648, 4294901760
    %1482 = vmatpush1.msra.mxu0 %v1481
    %v1483 = vand.u32 %v651, 4294901760
    %1484 = vmatprep.subr.mxu0 %v1483
    %v1485 = vand.u32 %v650, 4294901760
    %1486 = vmatpush1.msra.mxu0 %v1485
    %v1487 = vand.u32 %v653, 4294901760
    %1488 = vmatprep.subr.mxu0 %v1487
    %v1489 = vand.u32 %v652, 4294901760
    %1490 = vmatpush1.msra.mxu0 %v1489
    %v1491 = vand.u32 %v655, 4294901760
    %1492 = vmatprep.subr.mxu0 %v1491
    %v1493 = vand.u32 %v654, 4294901760
    %1494 = vmatpush1.msra.mxu0 %v1493
    %v1495 = vand.u32 %v657, 4294901760
    %1496 = vmatprep.subr.mxu0 %v1495
    %v1497 = vand.u32 %v656, 4294901760
    %1498 = vmatpush1.msra.mxu0 %v1497
    %v1499 = vand.u32 %v659, 4294901760
    %1500 = vmatprep.subr.mxu0 %v1499
    %v1501 = vand.u32 %v658, 4294901760
    %1502 = vmatpush1.msra.mxu0 %v1501
    %v1503 = vand.u32 %v661, 4294901760
    %1504 = vmatprep.subr.mxu0 %v1503
    %v1505 = vand.u32 %v660, 4294901760
    %1506 = vmatpush1.msra.mxu0 %v1505
    %v1507 = vand.u32 %v663, 4294901760
    %1508 = vmatprep.subr.mxu0 %v1507
    %v1509 = vand.u32 %v662, 4294901760
    %1510 = vmatpush1.msra.mxu0 %v1509
    %v1511 = vand.u32 %v665, 4294901760
    %1512 = vmatprep.subr.mxu0 %v1511
    %v1513 = vand.u32 %v664, 4294901760
    %1514 = vmatpush1.msra.mxu0 %v1513
    %v1515 = vand.u32 %v667, 4294901760
    %1516 = vmatprep.subr.mxu0 %v1515
    %v1517 = vand.u32 %v666, 4294901760
    %1518 = vmatpush1.msra.mxu0 %v1517
    %v1519 = vand.u32 %v669, 4294901760
    %1520 = vmatprep.subr.mxu0 %v1519
    %v1521 = vand.u32 %v668, 4294901760
    %1522 = vmatpush1.msra.mxu0 %v1521
    %v1523 = vand.u32 %v671, 4294901760
    %1524 = vmatprep.subr.mxu0 %v1523
    %v1525 = vand.u32 %v670, 4294901760
    %1526 = vmatpush1.msra.mxu0 %v1525
    %v1527 = vand.u32 %v673, 4294901760
    %1528 = vmatprep.subr.mxu0 %v1527
    %v1529 = vand.u32 %v672, 4294901760
    %1530 = vmatpush1.msra.mxu0 %v1529
    %v1531 = vand.u32 %v675, 4294901760
    %1532 = vmatprep.subr.mxu0 %v1531
    %v1533 = vand.u32 %v674, 4294901760
    %1534 = vmatpush1.msra.mxu0 %v1533
    %v1535 = vand.u32 %v677, 4294901760
    %1536 = vmatprep.subr.mxu0 %v1535
    %v1537 = vand.u32 %v676, 4294901760
    %1538 = vmatpush1.msra.mxu0 %v1537
    %v1539 = vand.u32 %v679, 4294901760
    %1540 = vmatprep.subr.mxu0 %v1539
    %v1541 = vand.u32 %v678, 4294901760
    %1542 = vmatpush1.msra.mxu0 %v1541
    %v1543 = vand.u32 %v681, 4294901760
    %1544 = vmatprep.subr.mxu0 %v1543
    %v1545 = vand.u32 %v680, 4294901760
    %1546 = vmatpush1.msra.mxu0 %v1545
    %v1547 = vand.u32 %v683, 4294901760
    %1548 = vmatprep.subr.mxu0 %v1547
    %v1549 = vand.u32 %v682, 4294901760
    %1550 = vmatpush1.msra.mxu0 %v1549
    %v1551 = vand.u32 %v685, 4294901760
    %1552 = vmatprep.subr.mxu0 %v1551
    %v1553 = vand.u32 %v684, 4294901760
    %1554 = vmatpush1.msra.mxu0 %v1553
    %v1555 = vand.u32 %v621, 4294901760
    %v1556 = vsub.f32 %v621, %v1555
    %v1557 = vand.u32 %v1556, 4294901760
    %1558 = vmatprep.mubr.f32.mxu0 %v1557
    %v1559 = vand.u32 %v620, 4294901760
    %v1560 = vsub.f32 %v620, %v1559
    %v1561 = vand.u32 %v1560, 4294901760
    %1562 = vmatmul.mubr.f32.gmra.mrb[0].mxu0 %v1561
    %v1563 = vpop.f32.mrb[0].mxu0
    %v1564 = vadd.f32 %v1423, %v1563
    %v1565 = vpop.f32.mrb[0].mxu0
    %v1566 = vadd.f32 %v1425, %v1565
    %1567 = vdwg.mxu0
    %v1568 = vand.u32 %v623, 4294901760
    %v1569 = vsub.f32 %v623, %v1568
    %v1570 = vand.u32 %v1569, 4294901760
    %1571 = vmatprep.subr.mxu0 %v1570
    %v1572 = vand.u32 %v622, 4294901760
    %v1573 = vsub.f32 %v622, %v1572
    %v1574 = vand.u32 %v1573, 4294901760
    %1575 = vmatpush1.msra.mxu0 %v1574
    %v1576 = vand.u32 %v625, 4294901760
    %v1577 = vsub.f32 %v625, %v1576
    %v1578 = vand.u32 %v1577, 4294901760
    %1579 = vmatprep.subr.mxu0 %v1578
    %v1580 = vand.u32 %v624, 4294901760
    %v1581 = vsub.f32 %v624, %v1580
    %v1582 = vand.u32 %v1581, 4294901760
    %1583 = vmatpush1.msra.mxu0 %v1582
    %v1584 = vand.u32 %v627, 4294901760
    %v1585 = vsub.f32 %v627, %v1584
    %v1586 = vand.u32 %v1585, 4294901760
    %1587 = vmatprep.subr.mxu0 %v1586
    %v1588 = vand.u32 %v626, 4294901760
    %v1589 = vsub.f32 %v626, %v1588
    %v1590 = vand.u32 %v1589, 4294901760
    %1591 = vmatpush1.msra.mxu0 %v1590
    %v1592 = vand.u32 %v629, 4294901760
    %v1593 = vsub.f32 %v629, %v1592
    %v1594 = vand.u32 %v1593, 4294901760
    %1595 = vmatprep.subr.mxu0 %v1594
    %v1596 = vand.u32 %v628, 4294901760
    %v1597 = vsub.f32 %v628, %v1596
    %v1598 = vand.u32 %v1597, 4294901760
    %1599 = vmatpush1.msra.mxu0 %v1598
    %v1600 = vand.u32 %v631, 4294901760
    %v1601 = vsub.f32 %v631, %v1600
    %v1602 = vand.u32 %v1601, 4294901760
    %1603 = vmatprep.subr.mxu0 %v1602
    %v1604 = vand.u32 %v630, 4294901760
    %v1605 = vsub.f32 %v630, %v1604
    %v1606 = vand.u32 %v1605, 4294901760
    %1607 = vmatpush1.msra.mxu0 %v1606
    %v1608 = vand.u32 %v633, 4294901760
    %v1609 = vsub.f32 %v633, %v1608
    %v1610 = vand.u32 %v1609, 4294901760
    %1611 = vmatprep.subr.mxu0 %v1610
    %v1612 = vand.u32 %v632, 4294901760
    %v1613 = vsub.f32 %v632, %v1612
    %v1614 = vand.u32 %v1613, 4294901760
    %1615 = vmatpush1.msra.mxu0 %v1614
    %v1616 = vand.u32 %v635, 4294901760
    %v1617 = vsub.f32 %v635, %v1616
    %v1618 = vand.u32 %v1617, 4294901760
    %1619 = vmatprep.subr.mxu0 %v1618
    %v1620 = vand.u32 %v634, 4294901760
    %v1621 = vsub.f32 %v634, %v1620
    %v1622 = vand.u32 %v1621, 4294901760
    %1623 = vmatpush1.msra.mxu0 %v1622
    %v1624 = vand.u32 %v637, 4294901760
    %v1625 = vsub.f32 %v637, %v1624
    %v1626 = vand.u32 %v1625, 4294901760
    %1627 = vmatprep.subr.mxu0 %v1626
    %v1628 = vand.u32 %v636, 4294901760
    %v1629 = vsub.f32 %v636, %v1628
    %v1630 = vand.u32 %v1629, 4294901760
    %1631 = vmatpush1.msra.mxu0 %v1630
    %v1632 = vand.u32 %v639, 4294901760
    %v1633 = vsub.f32 %v639, %v1632
    %v1634 = vand.u32 %v1633, 4294901760
    %1635 = vmatprep.subr.mxu0 %v1634
    %v1636 = vand.u32 %v638, 4294901760
    %v1637 = vsub.f32 %v638, %v1636
    %v1638 = vand.u32 %v1637, 4294901760
    %1639 = vmatpush1.msra.mxu0 %v1638
    %v1640 = vand.u32 %v641, 4294901760
    %v1641 = vsub.f32 %v641, %v1640
    %v1642 = vand.u32 %v1641, 4294901760
    %1643 = vmatprep.subr.mxu0 %v1642
    %v1644 = vand.u32 %v640, 4294901760
    %v1645 = vsub.f32 %v640, %v1644
    %v1646 = vand.u32 %v1645, 4294901760
    %1647 = vmatpush1.msra.mxu0 %v1646
    %v1648 = vand.u32 %v643, 4294901760
    %v1649 = vsub.f32 %v643, %v1648
    %v1650 = vand.u32 %v1649, 4294901760
    %1651 = vmatprep.subr.mxu0 %v1650
    %v1652 = vand.u32 %v642, 4294901760
    %v1653 = vsub.f32 %v642, %v1652
    %v1654 = vand.u32 %v1653, 4294901760
    %1655 = vmatpush1.msra.mxu0 %v1654
    %v1656 = vand.u32 %v645, 4294901760
    %v1657 = vsub.f32 %v645, %v1656
    %v1658 = vand.u32 %v1657, 4294901760
    %1659 = vmatprep.subr.mxu0 %v1658
    %v1660 = vand.u32 %v644, 4294901760
    %v1661 = vsub.f32 %v644, %v1660
    %v1662 = vand.u32 %v1661, 4294901760
    %1663 = vmatpush1.msra.mxu0 %v1662
    %v1664 = vand.u32 %v647, 4294901760
    %v1665 = vsub.f32 %v647, %v1664
    %v1666 = vand.u32 %v1665, 4294901760
    %1667 = vmatprep.subr.mxu0 %v1666
    %v1668 = vand.u32 %v646, 4294901760
    %v1669 = vsub.f32 %v646, %v1668
    %v1670 = vand.u32 %v1669, 4294901760
    %1671 = vmatpush1.msra.mxu0 %v1670
    %v1672 = vand.u32 %v649, 4294901760
    %v1673 = vsub.f32 %v649, %v1672
    %v1674 = vand.u32 %v1673, 4294901760
    %1675 = vmatprep.subr.mxu0 %v1674
    %v1676 = vand.u32 %v648, 4294901760
    %v1677 = vsub.f32 %v648, %v1676
    %v1678 = vand.u32 %v1677, 4294901760
    %1679 = vmatpush1.msra.mxu0 %v1678
    %v1680 = vand.u32 %v651, 4294901760
    %v1681 = vsub.f32 %v651, %v1680
    %v1682 = vand.u32 %v1681, 4294901760
    %1683 = vmatprep.subr.mxu0 %v1682
    %v1684 = vand.u32 %v650, 4294901760
    %v1685 = vsub.f32 %v650, %v1684
    %v1686 = vand.u32 %v1685, 4294901760
    %1687 = vmatpush1.msra.mxu0 %v1686
    %v1688 = vand.u32 %v653, 4294901760
    %v1689 = vsub.f32 %v653, %v1688
    %v1690 = vand.u32 %v1689, 4294901760
    %1691 = vmatprep.subr.mxu0 %v1690
    %v1692 = vand.u32 %v652, 4294901760
    %v1693 = vsub.f32 %v652, %v1692
    %v1694 = vand.u32 %v1693, 4294901760
    %1695 = vmatpush1.msra.mxu0 %v1694
    %v1696 = vand.u32 %v655, 4294901760
    %v1697 = vsub.f32 %v655, %v1696
    %v1698 = vand.u32 %v1697, 4294901760
    %1699 = vmatprep.subr.mxu0 %v1698
    %v1700 = vand.u32 %v654, 4294901760
    %v1701 = vsub.f32 %v654, %v1700
    %v1702 = vand.u32 %v1701, 4294901760
    %1703 = vmatpush1.msra.mxu0 %v1702
    %v1704 = vand.u32 %v657, 4294901760
    %v1705 = vsub.f32 %v657, %v1704
    %v1706 = vand.u32 %v1705, 4294901760
    %1707 = vmatprep.subr.mxu0 %v1706
    %v1708 = vand.u32 %v656, 4294901760
    %v1709 = vsub.f32 %v656, %v1708
    %v1710 = vand.u32 %v1709, 4294901760
    %1711 = vmatpush1.msra.mxu0 %v1710
    %v1712 = vand.u32 %v659, 4294901760
    %v1713 = vsub.f32 %v659, %v1712
    %v1714 = vand.u32 %v1713, 4294901760
    %1715 = vmatprep.subr.mxu0 %v1714
    %v1716 = vand.u32 %v658, 4294901760
    %v1717 = vsub.f32 %v658, %v1716
    %v1718 = vand.u32 %v1717, 4294901760
    %1719 = vmatpush1.msra.mxu0 %v1718
    %v1720 = vand.u32 %v661, 4294901760
    %v1721 = vsub.f32 %v661, %v1720
    %v1722 = vand.u32 %v1721, 4294901760
    %1723 = vmatprep.subr.mxu0 %v1722
    %v1724 = vand.u32 %v660, 4294901760
    %v1725 = vsub.f32 %v660, %v1724
    %v1726 = vand.u32 %v1725, 4294901760
    %1727 = vmatpush1.msra.mxu0 %v1726
    %v1728 = vand.u32 %v663, 4294901760
    %v1729 = vsub.f32 %v663, %v1728
    %v1730 = vand.u32 %v1729, 4294901760
    %1731 = vmatprep.subr.mxu0 %v1730
    %v1732 = vand.u32 %v662, 4294901760
    %v1733 = vsub.f32 %v662, %v1732
    %v1734 = vand.u32 %v1733, 4294901760
    %1735 = vmatpush1.msra.mxu0 %v1734
    %v1736 = vand.u32 %v665, 4294901760
    %v1737 = vsub.f32 %v665, %v1736
    %v1738 = vand.u32 %v1737, 4294901760
    %1739 = vmatprep.subr.mxu0 %v1738
    %v1740 = vand.u32 %v664, 4294901760
    %v1741 = vsub.f32 %v664, %v1740
    %v1742 = vand.u32 %v1741, 4294901760
    %1743 = vmatpush1.msra.mxu0 %v1742
    %v1744 = vand.u32 %v667, 4294901760
    %v1745 = vsub.f32 %v667, %v1744
    %v1746 = vand.u32 %v1745, 4294901760
    %1747 = vmatprep.subr.mxu0 %v1746
    %v1748 = vand.u32 %v666, 4294901760
    %v1749 = vsub.f32 %v666, %v1748
    %v1750 = vand.u32 %v1749, 4294901760
    %1751 = vmatpush1.msra.mxu0 %v1750
    %v1752 = vand.u32 %v669, 4294901760
    %v1753 = vsub.f32 %v669, %v1752
    %v1754 = vand.u32 %v1753, 4294901760
    %1755 = vmatprep.subr.mxu0 %v1754
    %v1756 = vand.u32 %v668, 4294901760
    %v1757 = vsub.f32 %v668, %v1756
    %v1758 = vand.u32 %v1757, 4294901760
    %1759 = vmatpush1.msra.mxu0 %v1758
    %v1760 = vand.u32 %v671, 4294901760
    %v1761 = vsub.f32 %v671, %v1760
    %v1762 = vand.u32 %v1761, 4294901760
    %1763 = vmatprep.subr.mxu0 %v1762
    %v1764 = vand.u32 %v670, 4294901760
    %v1765 = vsub.f32 %v670, %v1764
    %v1766 = vand.u32 %v1765, 4294901760
    %1767 = vmatpush1.msra.mxu0 %v1766
    %v1768 = vand.u32 %v673, 4294901760
    %v1769 = vsub.f32 %v673, %v1768
    %v1770 = vand.u32 %v1769, 4294901760
    %1771 = vmatprep.subr.mxu0 %v1770
    %v1772 = vand.u32 %v672, 4294901760
    %v1773 = vsub.f32 %v672, %v1772
    %v1774 = vand.u32 %v1773, 4294901760
    %1775 = vmatpush1.msra.mxu0 %v1774
    %v1776 = vand.u32 %v675, 4294901760
    %v1777 = vsub.f32 %v675, %v1776
    %v1778 = vand.u32 %v1777, 4294901760
    %1779 = vmatprep.subr.mxu0 %v1778
    %v1780 = vand.u32 %v674, 4294901760
    %v1781 = vsub.f32 %v674, %v1780
    %v1782 = vand.u32 %v1781, 4294901760
    %1783 = vmatpush1.msra.mxu0 %v1782
    %v1784 = vand.u32 %v677, 4294901760
    %v1785 = vsub.f32 %v677, %v1784
    %v1786 = vand.u32 %v1785, 4294901760
    %1787 = vmatprep.subr.mxu0 %v1786
    %v1788 = vand.u32 %v676, 4294901760
    %v1789 = vsub.f32 %v676, %v1788
    %v1790 = vand.u32 %v1789, 4294901760
    %1791 = vmatpush1.msra.mxu0 %v1790
    %v1792 = vand.u32 %v679, 4294901760
    %v1793 = vsub.f32 %v679, %v1792
    %v1794 = vand.u32 %v1793, 4294901760
    %1795 = vmatprep.subr.mxu0 %v1794
    %v1796 = vand.u32 %v678, 4294901760
    %v1797 = vsub.f32 %v678, %v1796
    %v1798 = vand.u32 %v1797, 4294901760
    %1799 = vmatpush1.msra.mxu0 %v1798
    %v1800 = vand.u32 %v681, 4294901760
    %v1801 = vsub.f32 %v681, %v1800
    %v1802 = vand.u32 %v1801, 4294901760
    %1803 = vmatprep.subr.mxu0 %v1802
    %v1804 = vand.u32 %v680, 4294901760
    %v1805 = vsub.f32 %v680, %v1804
    %v1806 = vand.u32 %v1805, 4294901760
    %1807 = vmatpush1.msra.mxu0 %v1806
    %v1808 = vand.u32 %v683, 4294901760
    %v1809 = vsub.f32 %v683, %v1808
    %v1810 = vand.u32 %v1809, 4294901760
    %1811 = vmatprep.subr.mxu0 %v1810
    %v1812 = vand.u32 %v682, 4294901760
    %v1813 = vsub.f32 %v682, %v1812
    %v1814 = vand.u32 %v1813, 4294901760
    %1815 = vmatpush1.msra.mxu0 %v1814
    %v1816 = vand.u32 %v685, 4294901760
    %v1817 = vsub.f32 %v685, %v1816
    %v1818 = vand.u32 %v1817, 4294901760
    %1819 = vmatprep.subr.mxu0 %v1818
    %v1820 = vand.u32 %v684, 4294901760
    %v1821 = vsub.f32 %v684, %v1820
    %v1822 = vand.u32 %v1821, 4294901760
    %1823 = vmatpush1.msra.mxu0 %v1822
    %v1824 = vand.u32 %v621, 4294901760
    %1825 = vmatprep.mubr.f32.mxu0 %v1824
    %v1826 = vand.u32 %v620, 4294901760
    %1827 = vmatmul.mubr.f32.gmra.mrb[0].mxu0 %v1826
    %v1828 = vpop.f32.mrb[0].mxu0
    %v1829 = vadd.f32 %v1564, %v1828
    %v1830 = vpop.f32.mrb[0].mxu0
    %v1831 = vadd.f32 %v1566, %v1830
    %1832 = vdwg.mxu0
    %v1833 = vand.u32 %v623, 4294901760
    %1834 = vmatprep.subr.mxu0 %v1833
    %v1835 = vand.u32 %v622, 4294901760
    %1836 = vmatpush1.msra.mxu0 %v1835
    %v1837 = vand.u32 %v625, 4294901760
    %1838 = vmatprep.subr.mxu0 %v1837
    %v1839 = vand.u32 %v624, 4294901760
    %1840 = vmatpush1.msra.mxu0 %v1839
    %v1841 = vand.u32 %v627, 4294901760
    %1842 = vmatprep.subr.mxu0 %v1841
    %v1843 = vand.u32 %v626, 4294901760
    %1844 = vmatpush1.msra.mxu0 %v1843
    %v1845 = vand.u32 %v629, 4294901760
    %1846 = vmatprep.subr.mxu0 %v1845
    %v1847 = vand.u32 %v628, 4294901760
    %1848 = vmatpush1.msra.mxu0 %v1847
    %v1849 = vand.u32 %v631, 4294901760
    %1850 = vmatprep.subr.mxu0 %v1849
    %v1851 = vand.u32 %v630, 4294901760
    %1852 = vmatpush1.msra.mxu0 %v1851
    %v1853 = vand.u32 %v633, 4294901760
    %1854 = vmatprep.subr.mxu0 %v1853
    %v1855 = vand.u32 %v632, 4294901760
    %1856 = vmatpush1.msra.mxu0 %v1855
    %v1857 = vand.u32 %v635, 4294901760
    %1858 = vmatprep.subr.mxu0 %v1857
    %v1859 = vand.u32 %v634, 4294901760
    %1860 = vmatpush1.msra.mxu0 %v1859
    %v1861 = vand.u32 %v637, 4294901760
    %1862 = vmatprep.subr.mxu0 %v1861
    %v1863 = vand.u32 %v636, 4294901760
    %1864 = vmatpush1.msra.mxu0 %v1863
    %v1865 = vand.u32 %v639, 4294901760
    %1866 = vmatprep.subr.mxu0 %v1865
    %v1867 = vand.u32 %v638, 4294901760
    %1868 = vmatpush1.msra.mxu0 %v1867
    %v1869 = vand.u32 %v641, 4294901760
    %1870 = vmatprep.subr.mxu0 %v1869
    %v1871 = vand.u32 %v640, 4294901760
    %1872 = vmatpush1.msra.mxu0 %v1871
    %v1873 = vand.u32 %v643, 4294901760
    %1874 = vmatprep.subr.mxu0 %v1873
    %v1875 = vand.u32 %v642, 4294901760
    %1876 = vmatpush1.msra.mxu0 %v1875
    %v1877 = vand.u32 %v645, 4294901760
    %1878 = vmatprep.subr.mxu0 %v1877
    %v1879 = vand.u32 %v644, 4294901760
    %1880 = vmatpush1.msra.mxu0 %v1879
    %v1881 = vand.u32 %v647, 4294901760
    %1882 = vmatprep.subr.mxu0 %v1881
    %v1883 = vand.u32 %v646, 4294901760
    %1884 = vmatpush1.msra.mxu0 %v1883
    %v1885 = vand.u32 %v649, 4294901760
    %1886 = vmatprep.subr.mxu0 %v1885
    %v1887 = vand.u32 %v648, 4294901760
    %1888 = vmatpush1.msra.mxu0 %v1887
    %v1889 = vand.u32 %v651, 4294901760
    %1890 = vmatprep.subr.mxu0 %v1889
    %v1891 = vand.u32 %v650, 4294901760
    %1892 = vmatpush1.msra.mxu0 %v1891
    %v1893 = vand.u32 %v653, 4294901760
    %1894 = vmatprep.subr.mxu0 %v1893
    %v1895 = vand.u32 %v652, 4294901760
    %1896 = vmatpush1.msra.mxu0 %v1895
    %v1897 = vand.u32 %v655, 4294901760
    %1898 = vmatprep.subr.mxu0 %v1897
    %v1899 = vand.u32 %v654, 4294901760
    %1900 = vmatpush1.msra.mxu0 %v1899
    %v1901 = vand.u32 %v657, 4294901760
    %1902 = vmatprep.subr.mxu0 %v1901
    %v1903 = vand.u32 %v656, 4294901760
    %1904 = vmatpush1.msra.mxu0 %v1903
    %v1905 = vand.u32 %v659, 4294901760
    %1906 = vmatprep.subr.mxu0 %v1905
    %v1907 = vand.u32 %v658, 4294901760
    %1908 = vmatpush1.msra.mxu0 %v1907
    %v1909 = vand.u32 %v661, 4294901760
    %1910 = vmatprep.subr.mxu0 %v1909
    %v1911 = vand.u32 %v660, 4294901760
    %1912 = vmatpush1.msra.mxu0 %v1911
    %v1913 = vand.u32 %v663, 4294901760
    %1914 = vmatprep.subr.mxu0 %v1913
    %v1915 = vand.u32 %v662, 4294901760
    %1916 = vmatpush1.msra.mxu0 %v1915
    %v1917 = vand.u32 %v665, 4294901760
    %1918 = vmatprep.subr.mxu0 %v1917
    %v1919 = vand.u32 %v664, 4294901760
    %1920 = vmatpush1.msra.mxu0 %v1919
    %v1921 = vand.u32 %v667, 4294901760
    %1922 = vmatprep.subr.mxu0 %v1921
    %v1923 = vand.u32 %v666, 4294901760
    %1924 = vmatpush1.msra.mxu0 %v1923
    %v1925 = vand.u32 %v669, 4294901760
    %1926 = vmatprep.subr.mxu0 %v1925
    %v1927 = vand.u32 %v668, 4294901760
    %1928 = vmatpush1.msra.mxu0 %v1927
    %v1929 = vand.u32 %v671, 4294901760
    %1930 = vmatprep.subr.mxu0 %v1929
    %v1931 = vand.u32 %v670, 4294901760
    %1932 = vmatpush1.msra.mxu0 %v1931
    %v1933 = vand.u32 %v673, 4294901760
    %1934 = vmatprep.subr.mxu0 %v1933
    %v1935 = vand.u32 %v672, 4294901760
    %1936 = vmatpush1.msra.mxu0 %v1935
    %v1937 = vand.u32 %v675, 4294901760
    %1938 = vmatprep.subr.mxu0 %v1937
    %v1939 = vand.u32 %v674, 4294901760
    %1940 = vmatpush1.msra.mxu0 %v1939
    %v1941 = vand.u32 %v677, 4294901760
    %1942 = vmatprep.subr.mxu0 %v1941
    %v1943 = vand.u32 %v676, 4294901760
    %1944 = vmatpush1.msra.mxu0 %v1943
    %v1945 = vand.u32 %v679, 4294901760
    %1946 = vmatprep.subr.mxu0 %v1945
    %v1947 = vand.u32 %v678, 4294901760
    %1948 = vmatpush1.msra.mxu0 %v1947
    %v1949 = vand.u32 %v681, 4294901760
    %1950 = vmatprep.subr.mxu0 %v1949
    %v1951 = vand.u32 %v680, 4294901760
    %1952 = vmatpush1.msra.mxu0 %v1951
    %v1953 = vand.u32 %v683, 4294901760
    %1954 = vmatprep.subr.mxu0 %v1953
    %v1955 = vand.u32 %v682, 4294901760
    %1956 = vmatpush1.msra.mxu0 %v1955
    %v1957 = vand.u32 %v685, 4294901760
    %1958 = vmatprep.subr.mxu0 %v1957
    %v1959 = vand.u32 %v684, 4294901760
    %1960 = vmatpush1.msra.mxu0 %v1959
    %v1961 = vand.u32 %v621, 4294901760
    %1962 = vmatprep.mubr.f32.mxu0 %v1961
    %v1963 = vand.u32 %v620, 4294901760
    %1964 = vmatmul.mubr.f32.gmra.mrb[0].mxu0 %v1963
    %v1965 = vpop.f32.mrb[0].mxu0
    %v1966 = vadd.f32 %v1829, %v1965
    %v1967 = vpop.f32.mrb[0].mxu0
    %v1968 = vadd.f32 %v1831, %v1967
    %1969 = vdwg.mxu0
    %1970 = vst [vmem:[#allocation8] sm:$0xff] %v1966
    %1971 = vst [vmem:[#allocation8 + $0x8] sm:$0xff] %v1968
    // Predicated region
    $region26: #{tpu_custom_call.1} parent=1 // pred_check
      _
    $region27: #{tpu_custom_call.1} parent=1 // pred_check_branch
      %1973 = sbr.rel (0) target = $region29
    $region28: #{tpu_custom_call.1} parent=1 // pred_region
      %s1975 = ssub.s32 256, 256
      %1976 = vsyncadd [#allocation4], %s1975
      %s1978 = sshll.u32 [#allocation8], 4
      %s1979 = int_to_ptr.vmem [resolvable:$true] %s1978
      %1981 = dma.vmem_to_hbm [thread:$0]  %s1979, 256, %s3, [#allocation4]
    $region29: #{tpu_custom_call.1} parent=1 // pred_fallthru
      _
    // Predicated region
    $region30: #{tpu_custom_call.1} parent=1 // pred_check
      _
    $region31: #{tpu_custom_call.1} parent=1 // pred_check_branch
      %1983 = sbr.rel (0) target = $region33
    $region32: #{tpu_custom_call.1} parent=1 // pred_region
      %1984 = dma.done [#allocation4], 256
    $region33: #{tpu_custom_call.1} parent=1 // pred_fallthru
      _
    %1985 = vsyncpa [#allocation3], 1
    %1986 = vsyncpa [#allocation6], 1
    %1987 = vsyncpa [#allocation4], 1

</llo_original>
